<compile_context>
chip_gen: v7x
topology: tpu7x:2x2x1
jax: 0.10.0
libtpu: 0.0.40
codegen_flags: <defaults>
</compile_context>

<pallas_src>
import functools

import jax
import jax.numpy as jnp
from jax import lax
from jax.experimental import pallas as pl
from jax.experimental.pallas import tpu as pltpu


def _desolver_kernel(dt_ref, y0_ref, w1t_ref, b1t_ref, w2t_ref, b2t_ref,
                     out_ref, y_scratch, *, substeps):
    """dt_ref: SMEM (T,); y0_ref: (D, n_tile); out_ref: (n_tile, T*D);
    y_scratch: VMEM (T*D, n_tile) time-major history of states."""
    D, n_tile = y0_ref.shape
    H = w1t_ref.shape[0]
    T = dt_ref.shape[0]

    # Hoisted once per tile: bf16 MXU weights (pre-cast in the wrapper), biases
    # broadcast once to the full lane-dense tile width.
    w1 = w1t_ref[...]                                   # (H, D) bf16
    w2 = w2t_ref[...]                                   # (D, H) bf16
    b1 = jnp.broadcast_to(b1t_ref[...], (H, n_tile))    # (H, n_tile) f32
    b2 = jnp.broadcast_to(b2t_ref[...], (D, n_tile))    # (D, n_tile) f32
    inv_sub = jnp.float32(1.0 / substeps)

    def ode_func(y):
        # dy/dt = W2^T tanh(W1^T y + b1) + b2, trajectories on the lane axis.
        # bf16 casts are limited to the two matmul operands; all elementwise RK4
        # math and the tanh input/output stay f32.
        h = jnp.tanh(
            jnp.dot(w1, y.astype(jnp.bfloat16),
                    preferred_element_type=jnp.float32) + b1)
        return jnp.dot(w2, h.astype(jnp.bfloat16),
                       preferred_element_type=jnp.float32) + b2

    def rk4_substep(y, dt):
        # Running-accumulator RK4: at most {y, acc, k, staged input} live.
        half = 0.5 * dt
        k = ode_func(y)                      # k1
        acc = k
        k = ode_func(y + half * k)           # k2
        acc = acc + 2.0 * k
        k = ode_func(y + half * k)           # k3
        acc = acc + 2.0 * k
        k = ode_func(y + dt * k)             # k4
        acc = acc + k
        return y + (dt * (1.0 / 6.0)) * acc

    y0 = y0_ref[...]
    # odeint's first output is the state at t_steps[0] == the initial value.
    y_scratch[pl.ds(0, D), :] = y0

    def time_step(i, y):
        dt = dt_ref[i] * inv_sub
        # Fixed number of internal RK4 sub-steps per requested output interval.
        # TODO(synk): adaptive step-size control (dopri5 with rtol/atol) has no
        # clean Pallas equivalent; fixed-step sub-stepped RK4 is used instead.
        if substeps <= 4:
            for _ in range(substeps):        # static unroll (small, no spills)
                y = rk4_substep(y, dt)
        else:
            # Rolled loop bounds vreg live ranges for large substeps.
            y = lax.fori_loop(0, substeps, lambda _, yy: rk4_substep(yy, dt), y)
        row = i * D
        if D % 8 == 0:
            row = pl.multiple_of(row, 8)     # sublane-aligned dynamic store
        y_scratch[pl.ds(row, D), :] = y
        return y

    lax.fori_loop(1, T, time_step, y0)

    # Single lane-dense writeback: (T*D, n_tile) -> (n_tile, T*D).
    out_ref[...] = y_scratch[...].T.astype(out_ref.dtype)


def _pick_n_tile(n, max_tile):
    """Largest divisor of n that is a multiple of 8 and <= max_tile (else n).

    Whenever n >= 16 the tile is additionally capped at n // 2 so there are at
    least two parallel grid iterations (keeps v7x's second TensorCore busy)."""
    max_tile = max(8, min(max_tile, n))
    if n >= 16:
        max_tile = min(max_tile, n // 2)
    cand = max_tile - (max_tile % 8)
    while cand >= 8:
        if n % cand == 0:
            return cand
        cand -= 8
    return n  # awkward N: single full-dim tile (block dim == array dim is legal)


def desolver_forward(first_pt, t_steps2predict, params, *, substeps=4):
    """first_pt: (n_traj_samples, n_traj, n_dim); t_steps2predict: (T,).

    Returns pred_y of shape (n_traj_samples, n_traj, T, n_dim), matching the
    PyTorch module's permute(1, 2, 0, 3) output layout.
    """
    n_traj_samples, n_traj, n_dim = first_pt.shape
    T = t_steps2predict.shape[0]
    N = n_traj_samples * n_traj
    w1, b1, w2, b2 = params
    H = w1.shape[1]

    # Trajectories-on-lanes working layout: state (D, N); weights pre-transposed
    # and pre-cast to bf16 (MXU operands); biases as column vectors.
    y0t = jnp.transpose(first_pt.reshape(N, n_dim).astype(jnp.float32))  # (D, N)
    w1t = jnp.transpose(w1).astype(jnp.bfloat16)                          # (H, D)
    w2t = jnp.transpose(w2).astype(jnp.bfloat16)                          # (D, H)
    b1t = b1.reshape(H, 1).astype(jnp.float32)
    b2t = b2.reshape(n_dim, 1).astype(jnp.float32)

    t = t_steps2predict.astype(jnp.float32)
    # dt[0] is unused (initial value is emitted directly).
    dt = jnp.concatenate([jnp.zeros((1,), jnp.float32), t[1:] - t[:-1]])

    # VMEM working-set bytes per trajectory column: double-buffered output block
    # + (T*D, n_tile) history scratch + double-buffered y0 block + live RK4
    # intermediates.  Budget kept well under v7x's 64 MiB physical VMEM
    # (v5e/v6e have 128 MiB and tolerate a larger budget / T chunk).
    per_col_bytes = (2 * T * n_dim + T * n_dim + 2 * n_dim + 8 * n_dim) * 4
    vmem_budget = 40 * 1024 * 1024
    max_tile = min(512, max(8, vmem_budget // per_col_bytes))
    n_tile = _pick_n_tile(N, max_tile)
    vmem_limit = min(48 * 1024 * 1024,
                     max(32 * 1024 * 1024,
                         int(1.5 * per_col_bytes * n_tile) + (2 << 20)))

    grid_spec = pltpu.PrefetchScalarGridSpec(
        num_scalar_prefetch=1,                   # dt -> SMEM
        grid=(N // n_tile,),                     # independent trajectory tiles
        in_specs=[
            pl.BlockSpec((n_dim, n_tile), lambda n, dt_s: (0, n)),   # y0 tile
            pl.BlockSpec((H, n_dim), lambda n, dt_s: (0, 0)),        # W1^T (bf16)
            pl.BlockSpec((H, 1), lambda n, dt_s: (0, 0)),            # b1 column
            pl.BlockSpec((n_dim, H), lambda n, dt_s: (0, 0)),        # W2^T (bf16)
            pl.BlockSpec((n_dim, 1), lambda n, dt_s: (0, 0)),        # b2 column
        ],
        out_specs=pl.BlockSpec((n_tile, T * n_dim), lambda n, dt_s: (n, 0)),
        scratch_shapes=[pltpu.VMEM((T * n_dim, n_tile), jnp.float32)],
    )

    # NOTE: for production sizes (large T*N), chunk T across multiple
    # pallas_calls (or add a T-chunk grid axis) sized from the same per-column
    # budget so the resident scratch + double-buffered output block stay inside
    # the per-generation VMEM capacity (64 MiB v7x / 128 MiB v5e-v6e).
    out = pl.pallas_call(
        functools.partial(_desolver_kernel, substeps=substeps),
        out_shape=jax.ShapeDtypeStruct((N, T * n_dim), jnp.float32),
        grid_spec=grid_spec,
        compiler_params=pltpu.CompilerParams(
            dimension_semantics=("parallel",),   # trajectory tiles -> 2 TCs on v7x
            vmem_limit_bytes=vmem_limit,
        ),
    )(dt, y0t, w1t, b1t, w2t, b2t)

    # Row-major (N, T, D) already equals permute(1, 2, 0, 3) of (T, S, B, D):
    # reshape only, no extra HBM transpose pass.
    return out.reshape(n_traj_samples, n_traj, T, n_dim)


def init_params(key, n_dim, hidden):
    k1, k2, k3, k4 = jax.random.split(key, 4)
    scale1 = 1.0 / jnp.sqrt(jnp.float32(n_dim))
    scale2 = 1.0 / jnp.sqrt(jnp.float32(hidden))
    w1 = jax.random.normal(k1, (n_dim, hidden), jnp.float32) * scale1
    b1 = jax.random.normal(k2, (hidden,), jnp.float32) * 0.01
    w2 = jax.random.normal(k3, (hidden, n_dim), jnp.float32) * scale2
    b2 = jax.random.normal(k4, (n_dim,), jnp.float32) * 0.01
    return w1, b1, w2, b2


def _reference(first_pt, t, params, substeps):
    """Pure-JAX reference mirroring the kernel math (transposed layout, bf16 MXU
    operands, fixed-step sub-stepped RK4)."""
    w1, b1, w2, b2 = params
    S, B, D = first_pt.shape
    H = w1.shape[1]
    w1t = jnp.transpose(w1).astype(jnp.bfloat16)
    w2t = jnp.transpose(w2).astype(jnp.bfloat16)
    b1t = b1.reshape(H, 1).astype(jnp.float32)
    b2t = b2.reshape(D, 1).astype(jnp.float32)

    def f(y):
        h = jnp.tanh(jnp.dot(w1t, y.astype(jnp.bfloat16),
                             preferred_element_type=jnp.float32) + b1t)
        return jnp.dot(w2t, h.astype(jnp.bfloat16),
                       preferred_element_type=jnp.float32) + b2t

    y = jnp.transpose(first_pt.reshape(S * B, D).astype(jnp.float32))  # (D, N)
    outs = [y]
    for i in range(1, t.shape[0]):
        dt = (t[i] - t[i - 1]) / jnp.float32(substeps)
        for _ in range(substeps):
            k1 = f(y)
            k2 = f(y + 0.5 * dt * k1)
            k3 = f(y + 0.5 * dt * k2)
            k4 = f(y + dt * k3)
            y = y + (dt / 6.0) * (k1 + 2.0 * k2 + 2.0 * k3 + k4)
        outs.append(y)
    pred = jnp.stack(outs, axis=0)                      # (T, D, N)
    pred = jnp.transpose(pred, (2, 0, 1))               # (N, T, D)
    return pred.reshape(S, B, t.shape[0], D)


if __name__ == "__main__":
    n_traj_samples, n_traj, n_dim, hidden, T = 2, 4, 32, 32, 8
    substeps = 4

    key = jax.random.PRNGKey(0)
    k_x, k_p = jax.random.split(key)
    first_pt = jax.random.normal(
        k_x, (n_traj_samples, n_traj, n_dim), jnp.float32)
    t_steps2predict = jnp.linspace(0.0, 1.0, T, dtype=jnp.float32)
    params = init_params(k_p, n_dim, hidden)

    pred_y = desolver_forward(first_pt, t_steps2predict, params,
                              substeps=substeps)
    pred_y = jax.block_until_ready(pred_y)

    # Mirror the PyTorch module's runtime assertions (max-abs for the initial
    # value so sign cancellation can't hide a mismatch).
    assert pred_y.shape == (n_traj_samples, n_traj, T, n_dim)
    assert pred_y.shape[0] == n_traj_samples
    assert pred_y.shape[1] == n_traj
    init_err = float(jnp.max(jnp.abs(pred_y[:, :, 0, :] - first_pt)))
    assert init_err < 1e-3, (
        "The predicted initial value of ODE does not match the real initial value!")

    # Numerical check against a pure-JAX reference using the same integrator.
    ref = jax.block_until_ready(
        _reference(first_pt, t_steps2predict, params, substeps))
    max_err = float(jnp.max(jnp.abs(pred_y - ref)))
    assert max_err < 1e-3, f"kernel/reference mismatch, max abs err {max_err}"

    print("KERNEL_OK")
</pallas_src>

<mosaic_0001>
module attributes {stable_mosaic.version = 11 : i64} {
  func.func @_desolver_kernel(%arg0: i32, %arg1: memref<8xf32, #tpu.memory_space<smem>>, %arg2: memref<32x8xf32, #tpu.memory_space<vmem>>, %arg3: memref<32x32xbf16, #tpu.memory_space<vmem>>, %arg4: memref<32x1xf32, #tpu.memory_space<vmem>>, %arg5: memref<32x32xbf16, #tpu.memory_space<vmem>>, %arg6: memref<32x1xf32, #tpu.memory_space<vmem>>, %arg7: memref<8x256xf32, #tpu.memory_space<vmem>>, %arg8: memref<256x8xf32, #tpu.memory_space<vmem>>) attributes {dimension_semantics = [#tpu.dimension_semantics<parallel>], iteration_bounds = array<i64: 1>, scalar_prefetch = 1 : i64, scratch_operands = 1 : i64, tpu.core_type = #tpu.core_type<tc>, window_params = [{transform_indices = @transform_0, window_bounds = array<i64: 32, 8>}, {pipeline_mode = #tpu.pipeline_mode<synchronous>, transform_indices = @transform_1, window_bounds = array<i64: 32, 32>}, {pipeline_mode = #tpu.pipeline_mode<synchronous>, transform_indices = @transform_2, window_bounds = array<i64: 32, 1>}, {pipeline_mode = #tpu.pipeline_mode<synchronous>, transform_indices = @transform_3, window_bounds = array<i64: 32, 32>}, {pipeline_mode = #tpu.pipeline_mode<synchronous>, transform_indices = @transform_4, window_bounds = array<i64: 32, 1>}, {transform_indices = @transform_5, window_bounds = array<i64: 8, 256>}]} {
    %c0 = arith.constant 0 : index
    %c0_0 = arith.constant 0 : index
    %0 = vector.load %arg3[%c0, %c0_0] : memref<32x32xbf16, #tpu.memory_space<vmem>>, vector<32x32xbf16>
    %c0_1 = arith.constant 0 : index
    %c0_2 = arith.constant 0 : index
    %1 = vector.load %arg5[%c0_1, %c0_2] : memref<32x32xbf16, #tpu.memory_space<vmem>>, vector<32x32xbf16>
    %c0_3 = arith.constant 0 : index
    %c0_4 = arith.constant 0 : index
    %2 = vector.load %arg4[%c0_3, %c0_4] : memref<32x1xf32, #tpu.memory_space<vmem>>, vector<32x1xf32>
    %3 = vector.shape_cast %2 : vector<32x1xf32> to vector<32x1xf32>
    %4 = vector.broadcast %3 : vector<32x1xf32> to vector<32x8xf32>
    %c0_5 = arith.constant 0 : index
    %c0_6 = arith.constant 0 : index
    %5 = vector.load %arg6[%c0_5, %c0_6] : memref<32x1xf32, #tpu.memory_space<vmem>>, vector<32x1xf32>
    %6 = vector.shape_cast %5 : vector<32x1xf32> to vector<32x1xf32>
    %7 = vector.broadcast %6 : vector<32x1xf32> to vector<32x8xf32>
    %c0_7 = arith.constant 0 : index
    %c0_8 = arith.constant 0 : index
    %8 = vector.load %arg2[%c0_7, %c0_8] : memref<32x8xf32, #tpu.memory_space<vmem>>, vector<32x8xf32>
    %c0_9 = arith.constant 0 : index
    %c0_10 = arith.constant 0 : index
    %9 = vector.load %arg8[%c0_9, %c0_10] : memref<256x8xf32, #tpu.memory_space<vmem>>, vector<32x8xf32>
    tpu.vector_store %arg8[%c0_9, %c0_10], %8 {strides = array<i32>} : memref<256x8xf32, #tpu.memory_space<vmem>>, vector<32x8xf32>,
    %cst = arith.constant 2.500000e-01 : f32
    %c1_i32 = arith.constant 1 : i32
    %c7_i32 = arith.constant 7 : i32
    %10 = arith.addi %c1_i32, %c7_i32 : i32
    %c1_i32_11 = arith.constant 1 : i32
    %11 = scf.for %arg9 = %c1_i32 to %10 step %c1_i32_11 iter_args(%arg10 = %8) -> (vector<32x8xf32>)  : i32 {
      %15 = arith.index_cast %arg9 : i32 to index
      %16 = memref.load %arg1[%15] : memref<8xf32, #tpu.memory_space<smem>>
      %17 = arith.mulf %16, %cst : f32
      %cst_17 = arith.constant 5.000000e-01 : f32
      %18 = arith.mulf %cst_17, %17 : f32
      %19 = arith.truncf %arg10 : vector<32x8xf32> to vector<32x8xbf16>
      %cst_18 = arith.constant dense<0.000000e+00> : vector<32x8xf32>
      %20 = tpu.matmul %0, %19, %cst_18 {dimension_numbers = #tpu.dot_dimension_numbers<[1], [0], [0], [1], [0, 0, 1, 1], [], []>} : vector<32x32xbf16>, vector<32x8xbf16>, vector<32x8xf32> -> vector<32x8xf32>
      %21 = arith.addf %20, %4 : vector<32x8xf32>
      %22 = math.tanh %21 : vector<32x8xf32>
      %23 = arith.truncf %22 : vector<32x8xf32> to vector<32x8xbf16>
      %cst_19 = arith.constant dense<0.000000e+00> : vector<32x8xf32>
      %24 = tpu.matmul %1, %23, %cst_19 {dimension_numbers = #tpu.dot_dimension_numbers<[1], [0], [0], [1], [0, 0, 1, 1], [], []>} : vector<32x32xbf16>, vector<32x8xbf16>, vector<32x8xf32> -> vector<32x8xf32>
      %25 = arith.addf %24, %7 : vector<32x8xf32>
      %26 = vector.broadcast %18 : f32 to vector<32x8xf32>
      %27 = arith.mulf %26, %25 : vector<32x8xf32>
      %28 = arith.addf %arg10, %27 : vector<32x8xf32>
      %29 = arith.truncf %28 : vector<32x8xf32> to vector<32x8xbf16>
      %cst_20 = arith.constant dense<0.000000e+00> : vector<32x8xf32>
      %30 = tpu.matmul %0, %29, %cst_20 {dimension_numbers = #tpu.dot_dimension_numbers<[1], [0], [0], [1], [0, 0, 1, 1], [], []>} : vector<32x32xbf16>, vector<32x8xbf16>, vector<32x8xf32> -> vector<32x8xf32>
      %31 = arith.addf %30, %4 : vector<32x8xf32>
      %32 = math.tanh %31 : vector<32x8xf32>
      %33 = arith.truncf %32 : vector<32x8xf32> to vector<32x8xbf16>
      %cst_21 = arith.constant dense<0.000000e+00> : vector<32x8xf32>
      %34 = tpu.matmul %1, %33, %cst_21 {dimension_numbers = #tpu.dot_dimension_numbers<[1], [0], [0], [1], [0, 0, 1, 1], [], []>} : vector<32x32xbf16>, vector<32x8xbf16>, vector<32x8xf32> -> vector<32x8xf32>
      %35 = arith.addf %34, %7 : vector<32x8xf32>
      %cst_22 = arith.constant 2.000000e+00 : f32
      %36 = vector.broadcast %cst_22 : f32 to vector<32x8xf32>
      %37 = arith.mulf %36, %35 : vector<32x8xf32>
      %38 = arith.addf %25, %37 : vector<32x8xf32>
      %39 = vector.broadcast %18 : f32 to vector<32x8xf32>
      %40 = arith.mulf %39, %35 : vector<32x8xf32>
      %41 = arith.addf %arg10, %40 : vector<32x8xf32>
      %42 = arith.truncf %41 : vector<32x8xf32> to vector<32x8xbf16>
      %cst_23 = arith.constant dense<0.000000e+00> : vector<32x8xf32>
      %43 = tpu.matmul %0, %42, %cst_23 {dimension_numbers = #tpu.dot_dimension_numbers<[1], [0], [0], [1], [0, 0, 1, 1], [], []>} : vector<32x32xbf16>, vector<32x8xbf16>, vector<32x8xf32> -> vector<32x8xf32>
      %44 = arith.addf %43, %4 : vector<32x8xf32>
      %45 = math.tanh %44 : vector<32x8xf32>
      %46 = arith.truncf %45 : vector<32x8xf32> to vector<32x8xbf16>
      %cst_24 = arith.constant dense<0.000000e+00> : vector<32x8xf32>
      %47 = tpu.matmul %1, %46, %cst_24 {dimension_numbers = #tpu.dot_dimension_numbers<[1], [0], [0], [1], [0, 0, 1, 1], [], []>} : vector<32x32xbf16>, vector<32x8xbf16>, vector<32x8xf32> -> vector<32x8xf32>
      %48 = arith.addf %47, %7 : vector<32x8xf32>
      %cst_25 = arith.constant 2.000000e+00 : f32
      %49 = vector.broadcast %cst_25 : f32 to vector<32x8xf32>
      %50 = arith.mulf %49, %48 : vector<32x8xf32>
      %51 = arith.addf %38, %50 : vector<32x8xf32>
      %52 = vector.broadcast %17 : f32 to vector<32x8xf32>
      %53 = arith.mulf %52, %48 : vector<32x8xf32>
      %54 = arith.addf %arg10, %53 : vector<32x8xf32>
      %55 = arith.truncf %54 : vector<32x8xf32> to vector<32x8xbf16>
      %cst_26 = arith.constant dense<0.000000e+00> : vector<32x8xf32>
      %56 = tpu.matmul %0, %55, %cst_26 {dimension_numbers = #tpu.dot_dimension_numbers<[1], [0], [0], [1], [0, 0, 1, 1], [], []>} : vector<32x32xbf16>, vector<32x8xbf16>, vector<32x8xf32> -> vector<32x8xf32>
      %57 = arith.addf %56, %4 : vector<32x8xf32>
      %58 = math.tanh %57 : vector<32x8xf32>
      %59 = arith.truncf %58 : vector<32x8xf32> to vector<32x8xbf16>
      %cst_27 = arith.constant dense<0.000000e+00> : vector<32x8xf32>
      %60 = tpu.matmul %1, %59, %cst_27 {dimension_numbers = #tpu.dot_dimension_numbers<[1], [0], [0], [1], [0, 0, 1, 1], [], []>} : vector<32x32xbf16>, vector<32x8xbf16>, vector<32x8xf32> -> vector<32x8xf32>
      %61 = arith.addf %60, %7 : vector<32x8xf32>
      %62 = arith.addf %51, %61 : vector<32x8xf32>
      %cst_28 = arith.constant 0.166666672 : f32
      %63 = arith.mulf %17, %cst_28 : f32
      %64 = vector.broadcast %63 : f32 to vector<32x8xf32>
      %65 = arith.mulf %64, %62 : vector<32x8xf32>
      %66 = arith.addf %arg10, %65 : vector<32x8xf32>
      %cst_29 = arith.constant 5.000000e-01 : f32
      %67 = arith.mulf %cst_29, %17 : f32
      %68 = arith.truncf %66 : vector<32x8xf32> to vector<32x8xbf16>
      %cst_30 = arith.constant dense<0.000000e+00> : vector<32x8xf32>
      %69 = tpu.matmul %0, %68, %cst_30 {dimension_numbers = #tpu.dot_dimension_numbers<[1], [0], [0], [1], [0, 0, 1, 1], [], []>} : vector<32x32xbf16>, vector<32x8xbf16>, vector<32x8xf32> -> vector<32x8xf32>
      %70 = arith.addf %69, %4 : vector<32x8xf32>
      %71 = math.tanh %70 : vector<32x8xf32>
      %72 = arith.truncf %71 : vector<32x8xf32> to vector<32x8xbf16>
      %cst_31 = arith.constant dense<0.000000e+00> : vector<32x8xf32>
      %73 = tpu.matmul %1, %72, %cst_31 {dimension_numbers = #tpu.dot_dimension_numbers<[1], [0], [0], [1], [0, 0, 1, 1], [], []>} : vector<32x32xbf16>, vector<32x8xbf16>, vector<32x8xf32> -> vector<32x8xf32>
      %74 = arith.addf %73, %7 : vector<32x8xf32>
      %75 = vector.broadcast %67 : f32 to vector<32x8xf32>
      %76 = arith.mulf %75, %74 : vector<32x8xf32>
      %77 = arith.addf %66, %76 : vector<32x8xf32>
      %78 = arith.truncf %77 : vector<32x8xf32> to vector<32x8xbf16>
      %cst_32 = arith.constant dense<0.000000e+00> : vector<32x8xf32>
      %79 = tpu.matmul %0, %78, %cst_32 {dimension_numbers = #tpu.dot_dimension_numbers<[1], [0], [0], [1], [0, 0, 1, 1], [], []>} : vector<32x32xbf16>, vector<32x8xbf16>, vector<32x8xf32> -> vector<32x8xf32>
      %80 = arith.addf %79, %4 : vector<32x8xf32>
      %81 = math.tanh %80 : vector<32x8xf32>
      %82 = arith.truncf %81 : vector<32x8xf32> to vector<32x8xbf16>
      %cst_33 = arith.constant dense<0.000000e+00> : vector<32x8xf32>
      %83 = tpu.matmul %1, %82, %cst_33 {dimension_numbers = #tpu.dot_dimension_numbers<[1], [0], [0], [1], [0, 0, 1, 1], [], []>} : vector<32x32xbf16>, vector<32x8xbf16>, vector<32x8xf32> -> vector<32x8xf32>
      %84 = arith.addf %83, %7 : vector<32x8xf32>
      %cst_34 = arith.constant 2.000000e+00 : f32
      %85 = vector.broadcast %cst_34 : f32 to vector<32x8xf32>
      %86 = arith.mulf %85, %84 : vector<32x8xf32>
      %87 = arith.addf %74, %86 : vector<32x8xf32>
      %88 = vector.broadcast %67 : f32 to vector<32x8xf32>
      %89 = arith.mulf %88, %84 : vector<32x8xf32>
      %90 = arith.addf %66, %89 : vector<32x8xf32>
      %91 = arith.truncf %90 : vector<32x8xf32> to vector<32x8xbf16>
      %cst_35 = arith.constant dense<0.000000e+00> : vector<32x8xf32>
      %92 = tpu.matmul %0, %91, %cst_35 {dimension_numbers = #tpu.dot_dimension_numbers<[1], [0], [0], [1], [0, 0, 1, 1], [], []>} : vector<32x32xbf16>, vector<32x8xbf16>, vector<32x8xf32> -> vector<32x8xf32>
      %93 = arith.addf %92, %4 : vector<32x8xf32>
      %94 = math.tanh %93 : vector<32x8xf32>
      %95 = arith.truncf %94 : vector<32x8xf32> to vector<32x8xbf16>
      %cst_36 = arith.constant dense<0.000000e+00> : vector<32x8xf32>
      %96 = tpu.matmul %1, %95, %cst_36 {dimension_numbers = #tpu.dot_dimension_numbers<[1], [0], [0], [1], [0, 0, 1, 1], [], []>} : vector<32x32xbf16>, vector<32x8xbf16>, vector<32x8xf32> -> vector<32x8xf32>
      %97 = arith.addf %96, %7 : vector<32x8xf32>
      %cst_37 = arith.constant 2.000000e+00 : f32
      %98 = vector.broadcast %cst_37 : f32 to vector<32x8xf32>
      %99 = arith.mulf %98, %97 : vector<32x8xf32>
      %100 = arith.addf %87, %99 : vector<32x8xf32>
      %101 = vector.broadcast %17 : f32 to vector<32x8xf32>
      %102 = arith.mulf %101, %97 : vector<32x8xf32>
      %103 = arith.addf %66, %102 : vector<32x8xf32>
      %104 = arith.truncf %103 : vector<32x8xf32> to vector<32x8xbf16>
      %cst_38 = arith.constant dense<0.000000e+00> : vector<32x8xf32>
      %105 = tpu.matmul %0, %104, %cst_38 {dimension_numbers = #tpu.dot_dimension_numbers<[1], [0], [0], [1], [0, 0, 1, 1], [], []>} : vector<32x32xbf16>, vector<32x8xbf16>, vector<32x8xf32> -> vector<32x8xf32>
      %106 = arith.addf %105, %4 : vector<32x8xf32>
      %107 = math.tanh %106 : vector<32x8xf32>
      %108 = arith.truncf %107 : vector<32x8xf32> to vector<32x8xbf16>
      %cst_39 = arith.constant dense<0.000000e+00> : vector<32x8xf32>
      %109 = tpu.matmul %1, %108, %cst_39 {dimension_numbers = #tpu.dot_dimension_numbers<[1], [0], [0], [1], [0, 0, 1, 1], [], []>} : vector<32x32xbf16>, vector<32x8xbf16>, vector<32x8xf32> -> vector<32x8xf32>
      %110 = arith.addf %109, %7 : vector<32x8xf32>
      %111 = arith.addf %100, %110 : vector<32x8xf32>
      %cst_40 = arith.constant 0.166666672 : f32
      %112 = arith.mulf %17, %cst_40 : f32
      %113 = vector.broadcast %112 : f32 to vector<32x8xf32>
      %114 = arith.mulf %113, %111 : vector<32x8xf32>
      %115 = arith.addf %66, %114 : vector<32x8xf32>
      %cst_41 = arith.constant 5.000000e-01 : f32
      %116 = arith.mulf %cst_41, %17 : f32
      %117 = arith.truncf %115 : vector<32x8xf32> to vector<32x8xbf16>
      %cst_42 = arith.constant dense<0.000000e+00> : vector<32x8xf32>
      %118 = tpu.matmul %0, %117, %cst_42 {dimension_numbers = #tpu.dot_dimension_numbers<[1], [0], [0], [1], [0, 0, 1, 1], [], []>} : vector<32x32xbf16>, vector<32x8xbf16>, vector<32x8xf32> -> vector<32x8xf32>
      %119 = arith.addf %118, %4 : vector<32x8xf32>
      %120 = math.tanh %119 : vector<32x8xf32>
      %121 = arith.truncf %120 : vector<32x8xf32> to vector<32x8xbf16>
      %cst_43 = arith.constant dense<0.000000e+00> : vector<32x8xf32>
      %122 = tpu.matmul %1, %121, %cst_43 {dimension_numbers = #tpu.dot_dimension_numbers<[1], [0], [0], [1], [0, 0, 1, 1], [], []>} : vector<32x32xbf16>, vector<32x8xbf16>, vector<32x8xf32> -> vector<32x8xf32>
      %123 = arith.addf %122, %7 : vector<32x8xf32>
      %124 = vector.broadcast %116 : f32 to vector<32x8xf32>
      %125 = arith.mulf %124, %123 : vector<32x8xf32>
      %126 = arith.addf %115, %125 : vector<32x8xf32>
      %127 = arith.truncf %126 : vector<32x8xf32> to vector<32x8xbf16>
      %cst_44 = arith.constant dense<0.000000e+00> : vector<32x8xf32>
      %128 = tpu.matmul %0, %127, %cst_44 {dimension_numbers = #tpu.dot_dimension_numbers<[1], [0], [0], [1], [0, 0, 1, 1], [], []>} : vector<32x32xbf16>, vector<32x8xbf16>, vector<32x8xf32> -> vector<32x8xf32>
      %129 = arith.addf %128, %4 : vector<32x8xf32>
      %130 = math.tanh %129 : vector<32x8xf32>
      %131 = arith.truncf %130 : vector<32x8xf32> to vector<32x8xbf16>
      %cst_45 = arith.constant dense<0.000000e+00> : vector<32x8xf32>
      %132 = tpu.matmul %1, %131, %cst_45 {dimension_numbers = #tpu.dot_dimension_numbers<[1], [0], [0], [1], [0, 0, 1, 1], [], []>} : vector<32x32xbf16>, vector<32x8xbf16>, vector<32x8xf32> -> vector<32x8xf32>
      %133 = arith.addf %132, %7 : vector<32x8xf32>
      %cst_46 = arith.constant 2.000000e+00 : f32
      %134 = vector.broadcast %cst_46 : f32 to vector<32x8xf32>
      %135 = arith.mulf %134, %133 : vector<32x8xf32>
      %136 = arith.addf %123, %135 : vector<32x8xf32>
      %137 = vector.broadcast %116 : f32 to vector<32x8xf32>
      %138 = arith.mulf %137, %133 : vector<32x8xf32>
      %139 = arith.addf %115, %138 : vector<32x8xf32>
      %140 = arith.truncf %139 : vector<32x8xf32> to vector<32x8xbf16>
      %cst_47 = arith.constant dense<0.000000e+00> : vector<32x8xf32>
      %141 = tpu.matmul %0, %140, %cst_47 {dimension_numbers = #tpu.dot_dimension_numbers<[1], [0], [0], [1], [0, 0, 1, 1], [], []>} : vector<32x32xbf16>, vector<32x8xbf16>, vector<32x8xf32> -> vector<32x8xf32>
      %142 = arith.addf %141, %4 : vector<32x8xf32>
      %143 = math.tanh %142 : vector<32x8xf32>
      %144 = arith.truncf %143 : vector<32x8xf32> to vector<32x8xbf16>
      %cst_48 = arith.constant dense<0.000000e+00> : vector<32x8xf32>
      %145 = tpu.matmul %1, %144, %cst_48 {dimension_numbers = #tpu.dot_dimension_numbers<[1], [0], [0], [1], [0, 0, 1, 1], [], []>} : vector<32x32xbf16>, vector<32x8xbf16>, vector<32x8xf32> -> vector<32x8xf32>
      %146 = arith.addf %145, %7 : vector<32x8xf32>
      %cst_49 = arith.constant 2.000000e+00 : f32
      %147 = vector.broadcast %cst_49 : f32 to vector<32x8xf32>
      %148 = arith.mulf %147, %146 : vector<32x8xf32>
      %149 = arith.addf %136, %148 : vector<32x8xf32>
      %150 = vector.broadcast %17 : f32 to vector<32x8xf32>
      %151 = arith.mulf %150, %146 : vector<32x8xf32>
      %152 = arith.addf %115, %151 : vector<32x8xf32>
      %153 = arith.truncf %152 : vector<32x8xf32> to vector<32x8xbf16>
      %cst_50 = arith.constant dense<0.000000e+00> : vector<32x8xf32>
      %154 = tpu.matmul %0, %153, %cst_50 {dimension_numbers = #tpu.dot_dimension_numbers<[1], [0], [0], [1], [0, 0, 1, 1], [], []>} : vector<32x32xbf16>, vector<32x8xbf16>, vector<32x8xf32> -> vector<32x8xf32>
      %155 = arith.addf %154, %4 : vector<32x8xf32>
      %156 = math.tanh %155 : vector<32x8xf32>
      %157 = arith.truncf %156 : vector<32x8xf32> to vector<32x8xbf16>
      %cst_51 = arith.constant dense<0.000000e+00> : vector<32x8xf32>
      %158 = tpu.matmul %1, %157, %cst_51 {dimension_numbers = #tpu.dot_dimension_numbers<[1], [0], [0], [1], [0, 0, 1, 1], [], []>} : vector<32x32xbf16>, vector<32x8xbf16>, vector<32x8xf32> -> vector<32x8xf32>
      %159 = arith.addf %158, %7 : vector<32x8xf32>
      %160 = arith.addf %149, %159 : vector<32x8xf32>
      %cst_52 = arith.constant 0.166666672 : f32
      %161 = arith.mulf %17, %cst_52 : f32
      %162 = vector.broadcast %161 : f32 to vector<32x8xf32>
      %163 = arith.mulf %162, %160 : vector<32x8xf32>
      %164 = arith.addf %115, %163 : vector<32x8xf32>
      %cst_53 = arith.constant 5.000000e-01 : f32
      %165 = arith.mulf %cst_53, %17 : f32
      %166 = arith.truncf %164 : vector<32x8xf32> to vector<32x8xbf16>
      %cst_54 = arith.constant dense<0.000000e+00> : vector<32x8xf32>
      %167 = tpu.matmul %0, %166, %cst_54 {dimension_numbers = #tpu.dot_dimension_numbers<[1], [0], [0], [1], [0, 0, 1, 1], [], []>} : vector<32x32xbf16>, vector<32x8xbf16>, vector<32x8xf32> -> vector<32x8xf32>
      %168 = arith.addf %167, %4 : vector<32x8xf32>
      %169 = math.tanh %168 : vector<32x8xf32>
      %170 = arith.truncf %169 : vector<32x8xf32> to vector<32x8xbf16>
      %cst_55 = arith.constant dense<0.000000e+00> : vector<32x8xf32>
      %171 = tpu.matmul %1, %170, %cst_55 {dimension_numbers = #tpu.dot_dimension_numbers<[1], [0], [0], [1], [0, 0, 1, 1], [], []>} : vector<32x32xbf16>, vector<32x8xbf16>, vector<32x8xf32> -> vector<32x8xf32>
      %172 = arith.addf %171, %7 : vector<32x8xf32>
      %173 = vector.broadcast %165 : f32 to vector<32x8xf32>
      %174 = arith.mulf %173, %172 : vector<32x8xf32>
      %175 = arith.addf %164, %174 : vector<32x8xf32>
      %176 = arith.truncf %175 : vector<32x8xf32> to vector<32x8xbf16>
      %cst_56 = arith.constant dense<0.000000e+00> : vector<32x8xf32>
      %177 = tpu.matmul %0, %176, %cst_56 {dimension_numbers = #tpu.dot_dimension_numbers<[1], [0], [0], [1], [0, 0, 1, 1], [], []>} : vector<32x32xbf16>, vector<32x8xbf16>, vector<32x8xf32> -> vector<32x8xf32>
      %178 = arith.addf %177, %4 : vector<32x8xf32>
      %179 = math.tanh %178 : vector<32x8xf32>
      %180 = arith.truncf %179 : vector<32x8xf32> to vector<32x8xbf16>
      %cst_57 = arith.constant dense<0.000000e+00> : vector<32x8xf32>
      %181 = tpu.matmul %1, %180, %cst_57 {dimension_numbers = #tpu.dot_dimension_numbers<[1], [0], [0], [1], [0, 0, 1, 1], [], []>} : vector<32x32xbf16>, vector<32x8xbf16>, vector<32x8xf32> -> vector<32x8xf32>
      %182 = arith.addf %181, %7 : vector<32x8xf32>
      %cst_58 = arith.constant 2.000000e+00 : f32
      %183 = vector.broadcast %cst_58 : f32 to vector<32x8xf32>
      %184 = arith.mulf %183, %182 : vector<32x8xf32>
      %185 = arith.addf %172, %184 : vector<32x8xf32>
      %186 = vector.broadcast %165 : f32 to vector<32x8xf32>
      %187 = arith.mulf %186, %182 : vector<32x8xf32>
      %188 = arith.addf %164, %187 : vector<32x8xf32>
      %189 = arith.truncf %188 : vector<32x8xf32> to vector<32x8xbf16>
      %cst_59 = arith.constant dense<0.000000e+00> : vector<32x8xf32>
      %190 = tpu.matmul %0, %189, %cst_59 {dimension_numbers = #tpu.dot_dimension_numbers<[1], [0], [0], [1], [0, 0, 1, 1], [], []>} : vector<32x32xbf16>, vector<32x8xbf16>, vector<32x8xf32> -> vector<32x8xf32>
      %191 = arith.addf %190, %4 : vector<32x8xf32>
      %192 = math.tanh %191 : vector<32x8xf32>
      %193 = arith.truncf %192 : vector<32x8xf32> to vector<32x8xbf16>
      %cst_60 = arith.constant dense<0.000000e+00> : vector<32x8xf32>
      %194 = tpu.matmul %1, %193, %cst_60 {dimension_numbers = #tpu.dot_dimension_numbers<[1], [0], [0], [1], [0, 0, 1, 1], [], []>} : vector<32x32xbf16>, vector<32x8xbf16>, vector<32x8xf32> -> vector<32x8xf32>
      %195 = arith.addf %194, %7 : vector<32x8xf32>
      %cst_61 = arith.constant 2.000000e+00 : f32
      %196 = vector.broadcast %cst_61 : f32 to vector<32x8xf32>
      %197 = arith.mulf %196, %195 : vector<32x8xf32>
      %198 = arith.addf %185, %197 : vector<32x8xf32>
      %199 = vector.broadcast %17 : f32 to vector<32x8xf32>
      %200 = arith.mulf %199, %195 : vector<32x8xf32>
      %201 = arith.addf %164, %200 : vector<32x8xf32>
      %202 = arith.truncf %201 : vector<32x8xf32> to vector<32x8xbf16>
      %cst_62 = arith.constant dense<0.000000e+00> : vector<32x8xf32>
      %203 = tpu.matmul %0, %202, %cst_62 {dimension_numbers = #tpu.dot_dimension_numbers<[1], [0], [0], [1], [0, 0, 1, 1], [], []>} : vector<32x32xbf16>, vector<32x8xbf16>, vector<32x8xf32> -> vector<32x8xf32>
      %204 = arith.addf %203, %4 : vector<32x8xf32>
      %205 = math.tanh %204 : vector<32x8xf32>
      %206 = arith.truncf %205 : vector<32x8xf32> to vector<32x8xbf16>
      %cst_63 = arith.constant dense<0.000000e+00> : vector<32x8xf32>
      %207 = tpu.matmul %1, %206, %cst_63 {dimension_numbers = #tpu.dot_dimension_numbers<[1], [0], [0], [1], [0, 0, 1, 1], [], []>} : vector<32x32xbf16>, vector<32x8xbf16>, vector<32x8xf32> -> vector<32x8xf32>
      %208 = arith.addf %207, %7 : vector<32x8xf32>
      %209 = arith.addf %198, %208 : vector<32x8xf32>
      %cst_64 = arith.constant 0.166666672 : f32
      %210 = arith.mulf %17, %cst_64 : f32
      %211 = vector.broadcast %210 : f32 to vector<32x8xf32>
      %212 = arith.mulf %211, %209 : vector<32x8xf32>
      %213 = arith.addf %164, %212 : vector<32x8xf32>
      %c32_i32 = arith.constant 32 : i32
      %214 = arith.muli %arg9, %c32_i32 : i32
      %215 = tpu.assume_multiple %214, 8 : i32
      %216 = arith.index_cast %215 : i32 to index
      %c0_65 = arith.constant 0 : index
      %217 = vector.load %arg8[%216, %c0_65] : memref<256x8xf32, #tpu.memory_space<vmem>>, vector<32x8xf32>
      tpu.vector_store %arg8[%216, %c0_65], %213 {strides = array<i32>} : memref<256x8xf32, #tpu.memory_space<vmem>>, vector<32x8xf32>,
      scf.yield %213 : vector<32x8xf32>
    }
    %c7_i32_12 = arith.constant 7 : i32
    %c0_13 = arith.constant 0 : index
    %c0_14 = arith.constant 0 : index
    %12 = vector.load %arg8[%c0_13, %c0_14] : memref<256x8xf32, #tpu.memory_space<vmem>>, vector<256x8xf32>
    %13 = tpu.transpose %12, [1, 0] : vector<256x8xf32> -> vector<8x256xf32>
    %c0_15 = arith.constant 0 : index
    %c0_16 = arith.constant 0 : index
    %14 = vector.load %arg7[%c0_15, %c0_16] : memref<8x256xf32, #tpu.memory_space<vmem>>, vector<8x256xf32>
    tpu.vector_store %arg7[%c0_15, %c0_16], %13 {strides = array<i32>} : memref<8x256xf32, #tpu.memory_space<vmem>>, vector<8x256xf32>,
    return
  }
  func.func @transform_0(%arg0: i32, %arg1: memref<8xf32, #tpu.memory_space<smem>>) -> (i32, i32) {
    %c0_i32 = arith.constant 0 : i32
    %c0_i32_0 = arith.constant 0 : i32
    return %c0_i32, %arg0 : i32, i32
  }
  func.func @transform_1(%arg0: i32, %arg1: memref<8xf32, #tpu.memory_space<smem>>) -> (i32, i32) {
    %c0_i32 = arith.constant 0 : i32
    %c0_i32_0 = arith.constant 0 : i32
    %c0_i32_1 = arith.constant 0 : i32
    return %c0_i32, %c0_i32_0 : i32, i32
  }
  func.func @transform_2(%arg0: i32, %arg1: memref<8xf32, #tpu.memory_space<smem>>) -> (i32, i32) {
    %c0_i32 = arith.constant 0 : i32
    %c0_i32_0 = arith.constant 0 : i32
    %c0_i32_1 = arith.constant 0 : i32
    return %c0_i32, %c0_i32_0 : i32, i32
  }
  func.func @transform_3(%arg0: i32, %arg1: memref<8xf32, #tpu.memory_space<smem>>) -> (i32, i32) {
    %c0_i32 = arith.constant 0 : i32
    %c0_i32_0 = arith.constant 0 : i32
    %c0_i32_1 = arith.constant 0 : i32
    return %c0_i32, %c0_i32_0 : i32, i32
  }
  func.func @transform_4(%arg0: i32, %arg1: memref<8xf32, #tpu.memory_space<smem>>) -> (i32, i32) {
    %c0_i32 = arith.constant 0 : i32
    %c0_i32_0 = arith.constant 0 : i32
    %c0_i32_1 = arith.constant 0 : i32
    return %c0_i32, %c0_i32_0 : i32, i32
  }
  func.func @transform_5(%arg0: i32, %arg1: memref<8xf32, #tpu.memory_space<smem>>) -> (i32, i32) {
    %c0_i32 = arith.constant 0 : i32
    %c0_i32_0 = arith.constant 0 : i32
    return %arg0, %c0_i32 : i32, i32
  }
}

</mosaic_0001>

<llo_original>
// kernel: tpu_custom_call.1
$region0: #{tpu_custom_call.1}
  #allocation0 [shape = 'u32[]', space=smem, size = 0x4, offset = 0x4, fixed_abs, tag = 'smem constant byte address 0x4 - core index']
  #allocation1 [shape = 'u32[144,128]{1,0:T(1,128)}', space=vmem, size = 0x12000, scoped, tag = 'internal scratch']
  #allocation2 [shape = 'f32[256,8]{1,0:T(8,128)}', space=vmem, size = 0x20000, scoped, tag = 'scratch operand']
  #allocation3 [shape = 's32[1]{0}', space=sflag, size = 0x4, scoped, tag = 'scoped memory for tpu_custom_call.1']
  #allocation4 [shape = 'u8[512]{0}', space=smem, size = 0x200, scoped, tag = 'prefetched SMEM operand 0']
  %s0 = inlined_call_operand.vmem [shape: f32[8], index: 0, kind: input, shape index: {}]
  %s1 = inlined_call_operand.vmem [shape: f32[32,8], index: 1, kind: input, shape index: {}]
  %s2 = inlined_call_operand.vmem [shape: bf16[32,32], index: 2, kind: input, shape index: {}]
  %s3 = inlined_call_operand.vmem [shape: f32[32,1], index: 3, kind: input, shape index: {}]
  %s4 = inlined_call_operand.vmem [shape: bf16[32,32], index: 4, kind: input, shape index: {}]
  %s5 = inlined_call_operand.vmem [shape: f32[32,1], index: 5, kind: input, shape index: {}]
  %s6 = inlined_call_operand.hbm [shape: f32[8,256], index: 6, kind: output, shape index: {}]
  %s7 = sld [smem:[#allocation0]]
  $region37: #{tpu_custom_call.1} parent=0
    _
  %s9 = ssub.s32 1, %s7
  %s10 = scalar_select 0, %s9, %s7
  %s11 = sshll.u32 %s0, 4
  %s12 = int_to_ptr.vmem [resolvable:$true] %s11
  %14 = dma.vmem_to_smem %s12, 16, [#allocation4], [#allocation3]
  %15 = dma.done [#allocation3], 16
  %16 = sfence
  $region1: #{tpu_custom_call.1} parent=0
    #allocation5 [shape = 'u8[8192]{0}', space=vmem, size = 0x2000, scoped, tag = 'output window, operand 0, single buffered']
    #allocation6 [shape = 's32[1]{0}', space=sflag, size = 0x4, scoped, tag = 'scoped memory for tpu_custom_call.1']
    %17 = vsyncpa [#allocation6], 0
    // Predicated region
    $region2: #{tpu_custom_call.1} parent=1 // pred_check
      _
    $region3: #{tpu_custom_call.1} parent=1 // pred_check_branch
      %19 = sbr.rel (0) target = $region5
    $region4: #{tpu_custom_call.1} parent=1 // pred_region
      _
    $region5: #{tpu_custom_call.1} parent=1 // pred_fallthru
      _
    // Predicated region
    $region6: #{tpu_custom_call.1} parent=1 // pred_check
      _
    $region7: #{tpu_custom_call.1} parent=1 // pred_check_branch
      %21 = sbr.rel (0) target = $region9
    $region8: #{tpu_custom_call.1} parent=1 // pred_region
      _
    $region9: #{tpu_custom_call.1} parent=1 // pred_fallthru
      _
    // Predicated region
    $region10: #{tpu_custom_call.1} parent=1 // pred_check
      _
    $region11: #{tpu_custom_call.1} parent=1 // pred_check_branch
      %23 = sbr.rel (0) target = $region13
    $region12: #{tpu_custom_call.1} parent=1 // pred_region
      _
    $region13: #{tpu_custom_call.1} parent=1 // pred_fallthru
      _
    // Predicated region
    $region14: #{tpu_custom_call.1} parent=1 // pred_check
      _
    $region15: #{tpu_custom_call.1} parent=1 // pred_check_branch
      %25 = sbr.rel (0) target = $region17
    $region16: #{tpu_custom_call.1} parent=1 // pred_region
      _
    $region17: #{tpu_custom_call.1} parent=1 // pred_fallthru
      _
    // Predicated region
    $region18: #{tpu_custom_call.1} parent=1 // pred_check
      _
    $region19: #{tpu_custom_call.1} parent=1 // pred_check_branch
      %27 = sbr.rel (0) target = $region21
    $region20: #{tpu_custom_call.1} parent=1 // pred_region
      _
    $region21: #{tpu_custom_call.1} parent=1 // pred_fallthru
      _
    %v29 = vld [vmem:[%s2] sm:$0xf]
    %v30 = vld [vmem:[%s2 + $0x4] sm:$0xf]
    %v31 = vld [vmem:[%s2 + $0x8] sm:$0xf]
    %v32 = vld [vmem:[%s2 + $0xc] sm:$0xf]
    %v33 = vld [vmem:[%s4] sm:$0xf]
    %v34 = vld [vmem:[%s4 + $0x4] sm:$0xf]
    %v35 = vld [vmem:[%s4 + $0x8] sm:$0xf]
    %v36 = vld [vmem:[%s4 + $0xc] sm:$0xf]
    %v37 = vld [vmem:[%s3] sm:$0xff]
    %v38 = vld [vmem:[%s3 + $0x8] sm:$0xff]
    %v39 = vld [vmem:[%s3 + $0x10] sm:$0xff]
    %v40 = vld [vmem:[%s3 + $0x18] sm:$0xff]
    %42 = vset.pattern.permute.xlu0 0
    %43 = vperm.xlu0 %42, %v37
    %v44 = vpop.permute.xlu0 %43
    %47 = vset.pattern.permute.xlu0 0
    %48 = vperm.xlu0 %47, %v38
    %v49 = vpop.permute.xlu0 %48
    %52 = vset.pattern.permute.xlu0 0
    %53 = vperm.xlu0 %52, %v39
    %v54 = vpop.permute.xlu0 %53
    %57 = vset.pattern.permute.xlu0 0
    %58 = vperm.xlu0 %57, %v40
    %v59 = vpop.permute.xlu0 %58
    %v61 = vld [vmem:[%s5] sm:$0xff]
    %v62 = vld [vmem:[%s5 + $0x8] sm:$0xff]
    %v63 = vld [vmem:[%s5 + $0x10] sm:$0xff]
    %v64 = vld [vmem:[%s5 + $0x18] sm:$0xff]
    %66 = vset.pattern.permute.xlu0 0
    %67 = vperm.xlu0 %66, %v61
    %v68 = vpop.permute.xlu0 %67
    %71 = vset.pattern.permute.xlu0 0
    %72 = vperm.xlu0 %71, %v62
    %v73 = vpop.permute.xlu0 %72
    %76 = vset.pattern.permute.xlu0 0
    %77 = vperm.xlu0 %76, %v63
    %v78 = vpop.permute.xlu0 %77
    %81 = vset.pattern.permute.xlu0 0
    %82 = vperm.xlu0 %81, %v64
    %v83 = vpop.permute.xlu0 %82
    %v85 = vld [vmem:[%s1] sm:$0xff]
    %v86 = vld [vmem:[%s1 + $0x8] sm:$0xff]
    %v87 = vld [vmem:[%s1 + $0x10] sm:$0xff]
    %v88 = vld [vmem:[%s1 + $0x18] sm:$0xff]
    %vm89 = vcmask 64512
    %90 = vst.msk [vmem:[#allocation2] sm:$0xff] %vm89, %v85
    %91 = vst.msk [vmem:[#allocation2 + $0x8] sm:$0xff] %vm89, %v86
    %92 = vst.msk [vmem:[#allocation2 + $0x10] sm:$0xff] %vm89, %v87
    %93 = vst.msk [vmem:[#allocation2 + $0x18] sm:$0xff] %vm89, %v88
    loop: start=1, step=1, limit=8
    $region22: #{tpu_custom_call.1} parent=1 // loop_pre_header
      _
    $region23: #{tpu_custom_call.1} parent=1 // loop_header
      %s95 = sphi 1, %s99
      %p96 = scmp.ge.s32.totalorder %s95, 8
      %v100 = vphi %v85, %v2044
      %v101 = vphi %v86, %v2045
      %v102 = vphi %v87, %v2046
      %v103 = vphi %v88, %v2047
    $region24: #{tpu_custom_call.1} parent=1 // loop_header_branch
      %98 = sbr.rel (%p96) target = $region28
    $region25: #{tpu_custom_call.1} parent=1 // loop_body
      %s104 = sld [smem:[#allocation4 + %s95]]
      %s105 = smul.f32 %s104, 0.25
      %s106 = smul.f32 %s105, 0.5
      %v107 = vpack.c.bf16 %v101, %v100
      %v108 = vpack.c.bf16 %v103, %v102
      %v113 = vunpack.c.l.b16 %v29
      %v114 = vunpack.c.l.b16 %v30
      %v115 = vunpack.c.l.b16 %v31
      %v116 = vunpack.c.l.b16 %v32
      %v117 = vpack.c.b16 %v114, %v113
      %v118 = vpack.c.b16 %v116, %v115
      %vm119 = vcmask 261120
      %v121 = vsel %vm119, %v117, 0
      %v124 = vsel %vm119, %v118, 0
      %126 = vmatprep.subr.bf16.mxu0 0
      %127 = vmatpush1.bf16.msra.mxu0 %v107
      %128 = vmatprep.subr.bf16.mxu0 0
      %129 = vmatpush1.bf16.msra.mxu0 %v108
      %130 = vmatprep.subr.bf16.mxu0 0
      %131 = vmatpush1.bf16.msra.mxu0 0
      %132 = vmatprep.subr.bf16.mxu0 0
      %133 = vmatpush1.bf16.msra.mxu0 0
      %134 = vmatprep.subr.bf16.mxu0 0
      %135 = vmatpush1.bf16.msra.mxu0 0
      %136 = vmatprep.subr.bf16.mxu0 0
      %137 = vmatpush1.bf16.msra.mxu0 0
      %138 = vmatprep.subr.bf16.mxu0 0
      %139 = vmatpush1.bf16.msra.mxu0 0
      %140 = vmatprep.subr.bf16.mxu0 0
      %141 = vmatpush1.bf16.msra.mxu0 0
      %142 = vmatprep.subr.bf16.mxu0 0
      %143 = vmatpush1.bf16.msra.mxu0 0
      %144 = vmatprep.subr.bf16.mxu0 0
      %145 = vmatpush1.bf16.msra.mxu0 0
      %146 = vmatprep.subr.bf16.mxu0 0
      %147 = vmatpush1.bf16.msra.mxu0 0
      %148 = vmatprep.subr.bf16.mxu0 0
      %149 = vmatpush1.bf16.msra.mxu0 0
      %150 = vmatprep.subr.bf16.mxu0 0
      %151 = vmatpush1.bf16.msra.mxu0 0
      %152 = vmatprep.subr.bf16.mxu0 0
      %153 = vmatpush1.bf16.msra.mxu0 0
      %154 = vmatprep.subr.bf16.mxu0 0
      %155 = vmatpush1.bf16.msra.mxu0 0
      %156 = vmatprep.subr.bf16.mxu0 0
      %157 = vmatpush1.bf16.msra.mxu0 0
      %158 = vmatprep.mubr.bf16.mxu0 0
      %159 = vmatmul.mubr.bf16.gmra.mrb[0].mxu0 %v121
      %v160 = vpop.f32.mrb[0].mxu0
      %v161 = vadd.f32 %v44, %v160
      %v162 = vpop.f32.mrb[0].mxu0
      %v163 = vpop.f32.mrb[0].mxu0
      %v164 = vadd.f32 %v49, %v163
      %v165 = vpop.f32.mrb[0].mxu0
      %166 = vmatprep.mubr.bf16.mxu0 0
      %167 = vmatmul.mubr.bf16.gmra.mrb[0].mxu0 %v124
      %v168 = vpop.f32.mrb[0].mxu0
      %v169 = vadd.f32 %v54, %v168
      %v170 = vpop.f32.mrb[0].mxu0
      %v171 = vpop.f32.mrb[0].mxu0
      %v172 = vadd.f32 %v59, %v171
      %v173 = vpop.f32.mrb[0].mxu0
      %174 = vdwg.mxu0
      %v175 = vtanh.pop %v161
      %v176 = vtanh.pop %v164
      %v177 = vtanh.pop %v169
      %v178 = vtanh.pop %v172
      %v179 = vpack.c.bf16 %v176, %v175
      %v180 = vpack.c.bf16 %v178, %v177
      %v185 = vunpack.c.l.b16 %v33
      %v186 = vunpack.c.l.b16 %v34
      %v187 = vunpack.c.l.b16 %v35
      %v188 = vunpack.c.l.b16 %v36
      %v189 = vpack.c.b16 %v186, %v185
      %v190 = vpack.c.b16 %v188, %v187
      %v192 = vsel %vm119, %v189, 0
      %v195 = vsel %vm119, %v190, 0
      %197 = vmatprep.subr.bf16.mxu0 0
      %198 = vmatpush1.bf16.msra.mxu0 %v179
      %199 = vmatprep.subr.bf16.mxu0 0
      %200 = vmatpush1.bf16.msra.mxu0 %v180
      %201 = vmatprep.subr.bf16.mxu0 0
      %202 = vmatpush1.bf16.msra.mxu0 0
      %203 = vmatprep.subr.bf16.mxu0 0
      %204 = vmatpush1.bf16.msra.mxu0 0
      %205 = vmatprep.subr.bf16.mxu0 0
      %206 = vmatpush1.bf16.msra.mxu0 0
      %207 = vmatprep.subr.bf16.mxu0 0
      %208 = vmatpush1.bf16.msra.mxu0 0
      %209 = vmatprep.subr.bf16.mxu0 0
      %210 = vmatpush1.bf16.msra.mxu0 0
      %211 = vmatprep.subr.bf16.mxu0 0
      %212 = vmatpush1.bf16.msra.mxu0 0
      %213 = vmatprep.subr.bf16.mxu0 0
      %214 = vmatpush1.bf16.msra.mxu0 0
      %215 = vmatprep.subr.bf16.mxu0 0
      %216 = vmatpush1.bf16.msra.mxu0 0
      %217 = vmatprep.subr.bf16.mxu0 0
      %218 = vmatpush1.bf16.msra.mxu0 0
      %219 = vmatprep.subr.bf16.mxu0 0
      %220 = vmatpush1.bf16.msra.mxu0 0
      %221 = vmatprep.subr.bf16.mxu0 0
      %222 = vmatpush1.bf16.msra.mxu0 0
      %223 = vmatprep.subr.bf16.mxu0 0
      %224 = vmatpush1.bf16.msra.mxu0 0
      %225 = vmatprep.subr.bf16.mxu0 0
      %226 = vmatpush1.bf16.msra.mxu0 0
      %227 = vmatprep.subr.bf16.mxu0 0
      %228 = vmatpush1.bf16.msra.mxu0 0
      %229 = vmatprep.mubr.bf16.mxu0 0
      %230 = vmatmul.mubr.bf16.gmra.mrb[0].mxu0 %v192
      %v231 = vpop.f32.mrb[0].mxu0
      %v232 = vadd.f32 %v68, %v231
      %v233 = vpop.f32.mrb[0].mxu0
      %v234 = vpop.f32.mrb[0].mxu0
      %v235 = vadd.f32 %v73, %v234
      %v236 = vpop.f32.mrb[0].mxu0
      %237 = vmatprep.mubr.bf16.mxu0 0
      %238 = vmatmul.mubr.bf16.gmra.mrb[0].mxu0 %v195
      %v239 = vpop.f32.mrb[0].mxu0
      %v240 = vadd.f32 %v78, %v239
      %v241 = vpop.f32.mrb[0].mxu0
      %v242 = vpop.f32.mrb[0].mxu0
      %v243 = vadd.f32 %v83, %v242
      %v244 = vpop.f32.mrb[0].mxu0
      %245 = vdwg.mxu0
      %v246 = vstv %s106
      %v247 = vmul.f32 %v246, %v232
      %v248 = vmul.f32 %v246, %v235
      %v249 = vmul.f32 %v246, %v240
      %v250 = vmul.f32 %v246, %v243
      %v251 = vadd.f32 %v100, %v247
      %v252 = vadd.f32 %v101, %v248
      %v253 = vadd.f32 %v102, %v249
      %v254 = vadd.f32 %v103, %v250
      %v255 = vpack.c.bf16 %v252, %v251
      %v256 = vpack.c.bf16 %v254, %v253
      %257 = vmatprep.subr.bf16.mxu0 0
      %258 = vmatpush1.bf16.msra.mxu0 %v255
      %259 = vmatprep.subr.bf16.mxu0 0
      %260 = vmatpush1.bf16.msra.mxu0 %v256
      %261 = vmatprep.subr.bf16.mxu0 0
      %262 = vmatpush1.bf16.msra.mxu0 0
      %263 = vmatprep.subr.bf16.mxu0 0
      %264 = vmatpush1.bf16.msra.mxu0 0
      %265 = vmatprep.subr.bf16.mxu0 0
      %266 = vmatpush1.bf16.msra.mxu0 0
      %267 = vmatprep.subr.bf16.mxu0 0
      %268 = vmatpush1.bf16.msra.mxu0 0
      %269 = vmatprep.subr.bf16.mxu0 0
      %270 = vmatpush1.bf16.msra.mxu0 0
      %271 = vmatprep.subr.bf16.mxu0 0
      %272 = vmatpush1.bf16.msra.mxu0 0
      %273 = vmatprep.subr.bf16.mxu0 0
      %274 = vmatpush1.bf16.msra.mxu0 0
      %275 = vmatprep.subr.bf16.mxu0 0
      %276 = vmatpush1.bf16.msra.mxu0 0
      %277 = vmatprep.subr.bf16.mxu0 0
      %278 = vmatpush1.bf16.msra.mxu0 0
      %279 = vmatprep.subr.bf16.mxu0 0
      %280 = vmatpush1.bf16.msra.mxu0 0
      %281 = vmatprep.subr.bf16.mxu0 0
      %282 = vmatpush1.bf16.msra.mxu0 0
      %283 = vmatprep.subr.bf16.mxu0 0
      %284 = vmatpush1.bf16.msra.mxu0 0
      %285 = vmatprep.subr.bf16.mxu0 0
      %286 = vmatpush1.bf16.msra.mxu0 0
      %287 = vmatprep.subr.bf16.mxu0 0
      %288 = vmatpush1.bf16.msra.mxu0 0
      %289 = vmatprep.mubr.bf16.mxu0 0
      %290 = vmatmul.mubr.bf16.gmra.mrb[0].mxu0 %v121
      %v291 = vpop.f32.mrb[0].mxu0
      %v292 = vadd.f32 %v44, %v291
      %v293 = vpop.f32.mrb[0].mxu0
      %v294 = vpop.f32.mrb[0].mxu0
      %v295 = vadd.f32 %v49, %v294
      %v296 = vpop.f32.mrb[0].mxu0
      %297 = vmatprep.mubr.bf16.mxu0 0
      %298 = vmatmul.mubr.bf16.gmra.mrb[0].mxu0 %v124
      %v299 = vpop.f32.mrb[0].mxu0
      %v300 = vadd.f32 %v54, %v299
      %v301 = vpop.f32.mrb[0].mxu0
      %v302 = vpop.f32.mrb[0].mxu0
      %v303 = vadd.f32 %v59, %v302
      %v304 = vpop.f32.mrb[0].mxu0
      %305 = vdwg.mxu0
      %v306 = vtanh.pop %v292
      %v307 = vtanh.pop %v295
      %v308 = vtanh.pop %v300
      %v309 = vtanh.pop %v303
      %v310 = vpack.c.bf16 %v307, %v306
      %v311 = vpack.c.bf16 %v309, %v308
      %312 = vmatprep.subr.bf16.mxu0 0
      %313 = vmatpush1.bf16.msra.mxu0 %v310
      %314 = vmatprep.subr.bf16.mxu0 0
      %315 = vmatpush1.bf16.msra.mxu0 %v311
      %316 = vmatprep.subr.bf16.mxu0 0
      %317 = vmatpush1.bf16.msra.mxu0 0
      %318 = vmatprep.subr.bf16.mxu0 0
      %319 = vmatpush1.bf16.msra.mxu0 0
      %320 = vmatprep.subr.bf16.mxu0 0
      %321 = vmatpush1.bf16.msra.mxu0 0
      %322 = vmatprep.subr.bf16.mxu0 0
      %323 = vmatpush1.bf16.msra.mxu0 0
      %324 = vmatprep.subr.bf16.mxu0 0
      %325 = vmatpush1.bf16.msra.mxu0 0
      %326 = vmatprep.subr.bf16.mxu0 0
      %327 = vmatpush1.bf16.msra.mxu0 0
      %328 = vmatprep.subr.bf16.mxu0 0
      %329 = vmatpush1.bf16.msra.mxu0 0
      %330 = vmatprep.subr.bf16.mxu0 0
      %331 = vmatpush1.bf16.msra.mxu0 0
      %332 = vmatprep.subr.bf16.mxu0 0
      %333 = vmatpush1.bf16.msra.mxu0 0
      %334 = vmatprep.subr.bf16.mxu0 0
      %335 = vmatpush1.bf16.msra.mxu0 0
      %336 = vmatprep.subr.bf16.mxu0 0
      %337 = vmatpush1.bf16.msra.mxu0 0
      %338 = vmatprep.subr.bf16.mxu0 0
      %339 = vmatpush1.bf16.msra.mxu0 0
      %340 = vmatprep.subr.bf16.mxu0 0
      %341 = vmatpush1.bf16.msra.mxu0 0
      %342 = vmatprep.subr.bf16.mxu0 0
      %343 = vmatpush1.bf16.msra.mxu0 0
      %344 = vmatprep.mubr.bf16.mxu0 0
      %345 = vmatmul.mubr.bf16.gmra.mrb[0].mxu0 %v192
      %v346 = vpop.f32.mrb[0].mxu0
      %v347 = vadd.f32 %v68, %v346
      %v348 = vpop.f32.mrb[0].mxu0
      %v349 = vpop.f32.mrb[0].mxu0
      %v350 = vadd.f32 %v73, %v349
      %v351 = vpop.f32.mrb[0].mxu0
      %352 = vmatprep.mubr.bf16.mxu0 0
      %353 = vmatmul.mubr.bf16.gmra.mrb[0].mxu0 %v195
      %v354 = vpop.f32.mrb[0].mxu0
      %v355 = vadd.f32 %v78, %v354
      %v356 = vpop.f32.mrb[0].mxu0
      %v357 = vpop.f32.mrb[0].mxu0
      %v358 = vadd.f32 %v83, %v357
      %v359 = vpop.f32.mrb[0].mxu0
      %360 = vdwg.mxu0
      %v361 = vmul.f32 %v347, 2.0
      %v362 = vmul.f32 %v350, 2.0
      %v363 = vmul.f32 %v355, 2.0
      %v364 = vmul.f32 %v358, 2.0
      %v365 = vadd.f32 %v232, %v361
      %v366 = vadd.f32 %v235, %v362
      %v367 = vadd.f32 %v240, %v363
      %v368 = vadd.f32 %v243, %v364
      %v369 = vmul.f32 %v246, %v347
      %v370 = vmul.f32 %v246, %v350
      %v371 = vmul.f32 %v246, %v355
      %v372 = vmul.f32 %v246, %v358
      %v373 = vadd.f32 %v100, %v369
      %v374 = vadd.f32 %v101, %v370
      %v375 = vadd.f32 %v102, %v371
      %v376 = vadd.f32 %v103, %v372
      %v377 = vpack.c.bf16 %v374, %v373
      %v378 = vpack.c.bf16 %v376, %v375
      %379 = vmatprep.subr.bf16.mxu0 0
      %380 = vmatpush1.bf16.msra.mxu0 %v377
      %381 = vmatprep.subr.bf16.mxu0 0
      %382 = vmatpush1.bf16.msra.mxu0 %v378
      %383 = vmatprep.subr.bf16.mxu0 0
      %384 = vmatpush1.bf16.msra.mxu0 0
      %385 = vmatprep.subr.bf16.mxu0 0
      %386 = vmatpush1.bf16.msra.mxu0 0
      %387 = vmatprep.subr.bf16.mxu0 0
      %388 = vmatpush1.bf16.msra.mxu0 0
      %389 = vmatprep.subr.bf16.mxu0 0
      %390 = vmatpush1.bf16.msra.mxu0 0
      %391 = vmatprep.subr.bf16.mxu0 0
      %392 = vmatpush1.bf16.msra.mxu0 0
      %393 = vmatprep.subr.bf16.mxu0 0
      %394 = vmatpush1.bf16.msra.mxu0 0
      %395 = vmatprep.subr.bf16.mxu0 0
      %396 = vmatpush1.bf16.msra.mxu0 0
      %397 = vmatprep.subr.bf16.mxu0 0
      %398 = vmatpush1.bf16.msra.mxu0 0
      %399 = vmatprep.subr.bf16.mxu0 0
      %400 = vmatpush1.bf16.msra.mxu0 0
      %401 = vmatprep.subr.bf16.mxu0 0
      %402 = vmatpush1.bf16.msra.mxu0 0
      %403 = vmatprep.subr.bf16.mxu0 0
      %404 = vmatpush1.bf16.msra.mxu0 0
      %405 = vmatprep.subr.bf16.mxu0 0
      %406 = vmatpush1.bf16.msra.mxu0 0
      %407 = vmatprep.subr.bf16.mxu0 0
      %408 = vmatpush1.bf16.msra.mxu0 0
      %409 = vmatprep.subr.bf16.mxu0 0
      %410 = vmatpush1.bf16.msra.mxu0 0
      %411 = vmatprep.mubr.bf16.mxu0 0
      %412 = vmatmul.mubr.bf16.gmra.mrb[0].mxu0 %v121
      %v413 = vpop.f32.mrb[0].mxu0
      %v414 = vadd.f32 %v44, %v413
      %v415 = vpop.f32.mrb[0].mxu0
      %v416 = vpop.f32.mrb[0].mxu0
      %v417 = vadd.f32 %v49, %v416
      %v418 = vpop.f32.mrb[0].mxu0
      %419 = vmatprep.mubr.bf16.mxu0 0
      %420 = vmatmul.mubr.bf16.gmra.mrb[0].mxu0 %v124
      %v421 = vpop.f32.mrb[0].mxu0
      %v422 = vadd.f32 %v54, %v421
      %v423 = vpop.f32.mrb[0].mxu0
      %v424 = vpop.f32.mrb[0].mxu0
      %v425 = vadd.f32 %v59, %v424
      %v426 = vpop.f32.mrb[0].mxu0
      %427 = vdwg.mxu0
      %v428 = vtanh.pop %v414
      %v429 = vtanh.pop %v417
      %v430 = vtanh.pop %v422
      %v431 = vtanh.pop %v425
      %v432 = vpack.c.bf16 %v429, %v428
      %v433 = vpack.c.bf16 %v431, %v430
      %434 = vmatprep.subr.bf16.mxu0 0
      %435 = vmatpush1.bf16.msra.mxu0 %v432
      %436 = vmatprep.subr.bf16.mxu0 0
      %437 = vmatpush1.bf16.msra.mxu0 %v433
      %438 = vmatprep.subr.bf16.mxu0 0
      %439 = vmatpush1.bf16.msra.mxu0 0
      %440 = vmatprep.subr.bf16.mxu0 0
      %441 = vmatpush1.bf16.msra.mxu0 0
      %442 = vmatprep.subr.bf16.mxu0 0
      %443 = vmatpush1.bf16.msra.mxu0 0
      %444 = vmatprep.subr.bf16.mxu0 0
      %445 = vmatpush1.bf16.msra.mxu0 0
      %446 = vmatprep.subr.bf16.mxu0 0
      %447 = vmatpush1.bf16.msra.mxu0 0
      %448 = vmatprep.subr.bf16.mxu0 0
      %449 = vmatpush1.bf16.msra.mxu0 0
      %450 = vmatprep.subr.bf16.mxu0 0
      %451 = vmatpush1.bf16.msra.mxu0 0
      %452 = vmatprep.subr.bf16.mxu0 0
      %453 = vmatpush1.bf16.msra.mxu0 0
      %454 = vmatprep.subr.bf16.mxu0 0
      %455 = vmatpush1.bf16.msra.mxu0 0
      %456 = vmatprep.subr.bf16.mxu0 0
      %457 = vmatpush1.bf16.msra.mxu0 0
      %458 = vmatprep.subr.bf16.mxu0 0
      %459 = vmatpush1.bf16.msra.mxu0 0
      %460 = vmatprep.subr.bf16.mxu0 0
      %461 = vmatpush1.bf16.msra.mxu0 0
      %462 = vmatprep.subr.bf16.mxu0 0
      %463 = vmatpush1.bf16.msra.mxu0 0
      %464 = vmatprep.subr.bf16.mxu0 0
      %465 = vmatpush1.bf16.msra.mxu0 0
      %466 = vmatprep.mubr.bf16.mxu0 0
      %467 = vmatmul.mubr.bf16.gmra.mrb[0].mxu0 %v192
      %v468 = vpop.f32.mrb[0].mxu0
      %v469 = vadd.f32 %v68, %v468
      %v470 = vpop.f32.mrb[0].mxu0
      %v471 = vpop.f32.mrb[0].mxu0
      %v472 = vadd.f32 %v73, %v471
      %v473 = vpop.f32.mrb[0].mxu0
      %474 = vmatprep.mubr.bf16.mxu0 0
      %475 = vmatmul.mubr.bf16.gmra.mrb[0].mxu0 %v195
      %v476 = vpop.f32.mrb[0].mxu0
      %v477 = vadd.f32 %v78, %v476
      %v478 = vpop.f32.mrb[0].mxu0
      %v479 = vpop.f32.mrb[0].mxu0
      %v480 = vadd.f32 %v83, %v479
      %v481 = vpop.f32.mrb[0].mxu0
      %482 = vdwg.mxu0
      %v483 = vmul.f32 %v469, 2.0
      %v484 = vmul.f32 %v472, 2.0
      %v485 = vmul.f32 %v477, 2.0
      %v486 = vmul.f32 %v480, 2.0
      %v487 = vadd.f32 %v365, %v483
      %v488 = vadd.f32 %v366, %v484
      %v489 = vadd.f32 %v367, %v485
      %v490 = vadd.f32 %v368, %v486
      %v491 = vstv %s105
      %v492 = vmul.f32 %v491, %v469
      %v493 = vmul.f32 %v491, %v472
      %v494 = vmul.f32 %v491, %v477
      %v495 = vmul.f32 %v491, %v480
      %v496 = vadd.f32 %v100, %v492
      %v497 = vadd.f32 %v101, %v493
      %v498 = vadd.f32 %v102, %v494
      %v499 = vadd.f32 %v103, %v495
      %v500 = vpack.c.bf16 %v497, %v496
      %v501 = vpack.c.bf16 %v499, %v498
      %502 = vmatprep.subr.bf16.mxu0 0
      %503 = vmatpush1.bf16.msra.mxu0 %v500
      %504 = vmatprep.subr.bf16.mxu0 0
      %505 = vmatpush1.bf16.msra.mxu0 %v501
      %506 = vmatprep.subr.bf16.mxu0 0
      %507 = vmatpush1.bf16.msra.mxu0 0
      %508 = vmatprep.subr.bf16.mxu0 0
      %509 = vmatpush1.bf16.msra.mxu0 0
      %510 = vmatprep.subr.bf16.mxu0 0
      %511 = vmatpush1.bf16.msra.mxu0 0
      %512 = vmatprep.subr.bf16.mxu0 0
      %513 = vmatpush1.bf16.msra.mxu0 0
      %514 = vmatprep.subr.bf16.mxu0 0
      %515 = vmatpush1.bf16.msra.mxu0 0
      %516 = vmatprep.subr.bf16.mxu0 0
      %517 = vmatpush1.bf16.msra.mxu0 0
      %518 = vmatprep.subr.bf16.mxu0 0
      %519 = vmatpush1.bf16.msra.mxu0 0
      %520 = vmatprep.subr.bf16.mxu0 0
      %521 = vmatpush1.bf16.msra.mxu0 0
      %522 = vmatprep.subr.bf16.mxu0 0
      %523 = vmatpush1.bf16.msra.mxu0 0
      %524 = vmatprep.subr.bf16.mxu0 0
      %525 = vmatpush1.bf16.msra.mxu0 0
      %526 = vmatprep.subr.bf16.mxu0 0
      %527 = vmatpush1.bf16.msra.mxu0 0
      %528 = vmatprep.subr.bf16.mxu0 0
      %529 = vmatpush1.bf16.msra.mxu0 0
      %530 = vmatprep.subr.bf16.mxu0 0
      %531 = vmatpush1.bf16.msra.mxu0 0
      %532 = vmatprep.subr.bf16.mxu0 0
      %533 = vmatpush1.bf16.msra.mxu0 0
      %534 = vmatprep.mubr.bf16.mxu0 0
      %535 = vmatmul.mubr.bf16.gmra.mrb[0].mxu0 %v121
      %v536 = vpop.f32.mrb[0].mxu0
      %v537 = vadd.f32 %v44, %v536
      %v538 = vpop.f32.mrb[0].mxu0
      %v539 = vpop.f32.mrb[0].mxu0
      %v540 = vadd.f32 %v49, %v539
      %v541 = vpop.f32.mrb[0].mxu0
      %542 = vmatprep.mubr.bf16.mxu0 0
      %543 = vmatmul.mubr.bf16.gmra.mrb[0].mxu0 %v124
      %v544 = vpop.f32.mrb[0].mxu0
      %v545 = vadd.f32 %v54, %v544
      %v546 = vpop.f32.mrb[0].mxu0
      %v547 = vpop.f32.mrb[0].mxu0
      %v548 = vadd.f32 %v59, %v547
      %v549 = vpop.f32.mrb[0].mxu0
      %550 = vdwg.mxu0
      %v551 = vtanh.pop %v537
      %v552 = vtanh.pop %v540
      %v553 = vtanh.pop %v545
      %v554 = vtanh.pop %v548
      %v555 = vpack.c.bf16 %v552, %v551
      %v556 = vpack.c.bf16 %v554, %v553
      %557 = vmatprep.subr.bf16.mxu0 0
      %558 = vmatpush1.bf16.msra.mxu0 %v555
      %559 = vmatprep.subr.bf16.mxu0 0
      %560 = vmatpush1.bf16.msra.mxu0 %v556
      %561 = vmatprep.subr.bf16.mxu0 0
      %562 = vmatpush1.bf16.msra.mxu0 0
      %563 = vmatprep.subr.bf16.mxu0 0
      %564 = vmatpush1.bf16.msra.mxu0 0
      %565 = vmatprep.subr.bf16.mxu0 0
      %566 = vmatpush1.bf16.msra.mxu0 0
      %567 = vmatprep.subr.bf16.mxu0 0
      %568 = vmatpush1.bf16.msra.mxu0 0
      %569 = vmatprep.subr.bf16.mxu0 0
      %570 = vmatpush1.bf16.msra.mxu0 0
      %571 = vmatprep.subr.bf16.mxu0 0
      %572 = vmatpush1.bf16.msra.mxu0 0
      %573 = vmatprep.subr.bf16.mxu0 0
      %574 = vmatpush1.bf16.msra.mxu0 0
      %575 = vmatprep.subr.bf16.mxu0 0
      %576 = vmatpush1.bf16.msra.mxu0 0
      %577 = vmatprep.subr.bf16.mxu0 0
      %578 = vmatpush1.bf16.msra.mxu0 0
      %579 = vmatprep.subr.bf16.mxu0 0
      %580 = vmatpush1.bf16.msra.mxu0 0
      %581 = vmatprep.subr.bf16.mxu0 0
      %582 = vmatpush1.bf16.msra.mxu0 0
      %583 = vmatprep.subr.bf16.mxu0 0
      %584 = vmatpush1.bf16.msra.mxu0 0
      %585 = vmatprep.subr.bf16.mxu0 0
      %586 = vmatpush1.bf16.msra.mxu0 0
      %587 = vmatprep.subr.bf16.mxu0 0
      %588 = vmatpush1.bf16.msra.mxu0 0
      %589 = vmatprep.mubr.bf16.mxu0 0
      %590 = vmatmul.mubr.bf16.gmra.mrb[0].mxu0 %v192
      %v591 = vpop.f32.mrb[0].mxu0
      %v592 = vadd.f32 %v68, %v591
      %v593 = vpop.f32.mrb[0].mxu0
      %v594 = vpop.f32.mrb[0].mxu0
      %v595 = vadd.f32 %v73, %v594
      %v596 = vpop.f32.mrb[0].mxu0
      %597 = vmatprep.mubr.bf16.mxu0 0
      %598 = vmatmul.mubr.bf16.gmra.mrb[0].mxu0 %v195
      %v599 = vpop.f32.mrb[0].mxu0
      %v600 = vadd.f32 %v78, %v599
      %v601 = vpop.f32.mrb[0].mxu0
      %v602 = vpop.f32.mrb[0].mxu0
      %v603 = vadd.f32 %v83, %v602
      %v604 = vpop.f32.mrb[0].mxu0
      %605 = vdwg.mxu0
      %v606 = vadd.f32 %v487, %v592
      %v607 = vadd.f32 %v488, %v595
      %v608 = vadd.f32 %v489, %v600
      %v609 = vadd.f32 %v490, %v603
      %s610 = smul.f32 %s105, 0.16666667
      %v611 = vstv %s610
      %v612 = vmul.f32 %v611, %v606
      %v613 = vmul.f32 %v611, %v607
      %v614 = vmul.f32 %v611, %v608
      %v615 = vmul.f32 %v611, %v609
      %v616 = vadd.f32 %v100, %v612
      %v617 = vadd.f32 %v101, %v613
      %v618 = vadd.f32 %v102, %v614
      %v619 = vadd.f32 %v103, %v615
      %v620 = vpack.c.bf16 %v617, %v616
      %v621 = vpack.c.bf16 %v619, %v618
      %622 = vmatprep.subr.bf16.mxu0 0
      %623 = vmatpush1.bf16.msra.mxu0 %v620
      %624 = vmatprep.subr.bf16.mxu0 0
      %625 = vmatpush1.bf16.msra.mxu0 %v621
      %626 = vmatprep.subr.bf16.mxu0 0
      %627 = vmatpush1.bf16.msra.mxu0 0
      %628 = vmatprep.subr.bf16.mxu0 0
      %629 = vmatpush1.bf16.msra.mxu0 0
      %630 = vmatprep.subr.bf16.mxu0 0
      %631 = vmatpush1.bf16.msra.mxu0 0
      %632 = vmatprep.subr.bf16.mxu0 0
      %633 = vmatpush1.bf16.msra.mxu0 0
      %634 = vmatprep.subr.bf16.mxu0 0
      %635 = vmatpush1.bf16.msra.mxu0 0
      %636 = vmatprep.subr.bf16.mxu0 0
      %637 = vmatpush1.bf16.msra.mxu0 0
      %638 = vmatprep.subr.bf16.mxu0 0
      %639 = vmatpush1.bf16.msra.mxu0 0
      %640 = vmatprep.subr.bf16.mxu0 0
      %641 = vmatpush1.bf16.msra.mxu0 0
      %642 = vmatprep.subr.bf16.mxu0 0
      %643 = vmatpush1.bf16.msra.mxu0 0
      %644 = vmatprep.subr.bf16.mxu0 0
      %645 = vmatpush1.bf16.msra.mxu0 0
      %646 = vmatprep.subr.bf16.mxu0 0
      %647 = vmatpush1.bf16.msra.mxu0 0
      %648 = vmatprep.subr.bf16.mxu0 0
      %649 = vmatpush1.bf16.msra.mxu0 0
      %650 = vmatprep.subr.bf16.mxu0 0
      %651 = vmatpush1.bf16.msra.mxu0 0
      %652 = vmatprep.subr.bf16.mxu0 0
      %653 = vmatpush1.bf16.msra.mxu0 0
      %654 = vmatprep.mubr.bf16.mxu0 0
      %655 = vmatmul.mubr.bf16.gmra.mrb[0].mxu0 %v121
      %v656 = vpop.f32.mrb[0].mxu0
      %v657 = vadd.f32 %v44, %v656
      %v658 = vpop.f32.mrb[0].mxu0
      %v659 = vpop.f32.mrb[0].mxu0
      %v660 = vadd.f32 %v49, %v659
      %v661 = vpop.f32.mrb[0].mxu0
      %662 = vmatprep.mubr.bf16.mxu0 0
      %663 = vmatmul.mubr.bf16.gmra.mrb[0].mxu0 %v124
      %v664 = vpop.f32.mrb[0].mxu0
      %v665 = vadd.f32 %v54, %v664
      %v666 = vpop.f32.mrb[0].mxu0
      %v667 = vpop.f32.mrb[0].mxu0
      %v668 = vadd.f32 %v59, %v667
      %v669 = vpop.f32.mrb[0].mxu0
      %670 = vdwg.mxu0
      %v671 = vtanh.pop %v657
      %v672 = vtanh.pop %v660
      %v673 = vtanh.pop %v665
      %v674 = vtanh.pop %v668
      %v675 = vpack.c.bf16 %v672, %v671
      %v676 = vpack.c.bf16 %v674, %v673
      %677 = vmatprep.subr.bf16.mxu0 0
      %678 = vmatpush1.bf16.msra.mxu0 %v675
      %679 = vmatprep.subr.bf16.mxu0 0
      %680 = vmatpush1.bf16.msra.mxu0 %v676
      %681 = vmatprep.subr.bf16.mxu0 0
      %682 = vmatpush1.bf16.msra.mxu0 0
      %683 = vmatprep.subr.bf16.mxu0 0
      %684 = vmatpush1.bf16.msra.mxu0 0
      %685 = vmatprep.subr.bf16.mxu0 0
      %686 = vmatpush1.bf16.msra.mxu0 0
      %687 = vmatprep.subr.bf16.mxu0 0
      %688 = vmatpush1.bf16.msra.mxu0 0
      %689 = vmatprep.subr.bf16.mxu0 0
      %690 = vmatpush1.bf16.msra.mxu0 0
      %691 = vmatprep.subr.bf16.mxu0 0
      %692 = vmatpush1.bf16.msra.mxu0 0
      %693 = vmatprep.subr.bf16.mxu0 0
      %694 = vmatpush1.bf16.msra.mxu0 0
      %695 = vmatprep.subr.bf16.mxu0 0
      %696 = vmatpush1.bf16.msra.mxu0 0
      %697 = vmatprep.subr.bf16.mxu0 0
      %698 = vmatpush1.bf16.msra.mxu0 0
      %699 = vmatprep.subr.bf16.mxu0 0
      %700 = vmatpush1.bf16.msra.mxu0 0
      %701 = vmatprep.subr.bf16.mxu0 0
      %702 = vmatpush1.bf16.msra.mxu0 0
      %703 = vmatprep.subr.bf16.mxu0 0
      %704 = vmatpush1.bf16.msra.mxu0 0
      %705 = vmatprep.subr.bf16.mxu0 0
      %706 = vmatpush1.bf16.msra.mxu0 0
      %707 = vmatprep.subr.bf16.mxu0 0
      %708 = vmatpush1.bf16.msra.mxu0 0
      %709 = vmatprep.mubr.bf16.mxu0 0
      %710 = vmatmul.mubr.bf16.gmra.mrb[0].mxu0 %v192
      %v711 = vpop.f32.mrb[0].mxu0
      %v712 = vadd.f32 %v68, %v711
      %v713 = vpop.f32.mrb[0].mxu0
      %v714 = vpop.f32.mrb[0].mxu0
      %v715 = vadd.f32 %v73, %v714
      %v716 = vpop.f32.mrb[0].mxu0
      %717 = vmatprep.mubr.bf16.mxu0 0
      %718 = vmatmul.mubr.bf16.gmra.mrb[0].mxu0 %v195
      %v719 = vpop.f32.mrb[0].mxu0
      %v720 = vadd.f32 %v78, %v719
      %v721 = vpop.f32.mrb[0].mxu0
      %v722 = vpop.f32.mrb[0].mxu0
      %v723 = vadd.f32 %v83, %v722
      %v724 = vpop.f32.mrb[0].mxu0
      %725 = vdwg.mxu0
      %v726 = vmul.f32 %v246, %v712
      %v727 = vmul.f32 %v246, %v715
      %v728 = vmul.f32 %v246, %v720
      %v729 = vmul.f32 %v246, %v723
      %v730 = vadd.f32 %v616, %v726
      %v731 = vadd.f32 %v617, %v727
      %v732 = vadd.f32 %v618, %v728
      %v733 = vadd.f32 %v619, %v729
      %v734 = vpack.c.bf16 %v731, %v730
      %v735 = vpack.c.bf16 %v733, %v732
      %736 = vmatprep.subr.bf16.mxu0 0
      %737 = vmatpush1.bf16.msra.mxu0 %v734
      %738 = vmatprep.subr.bf16.mxu0 0
      %739 = vmatpush1.bf16.msra.mxu0 %v735
      %740 = vmatprep.subr.bf16.mxu0 0
      %741 = vmatpush1.bf16.msra.mxu0 0
      %742 = vmatprep.subr.bf16.mxu0 0
      %743 = vmatpush1.bf16.msra.mxu0 0
      %744 = vmatprep.subr.bf16.mxu0 0
      %745 = vmatpush1.bf16.msra.mxu0 0
      %746 = vmatprep.subr.bf16.mxu0 0
      %747 = vmatpush1.bf16.msra.mxu0 0
      %748 = vmatprep.subr.bf16.mxu0 0
      %749 = vmatpush1.bf16.msra.mxu0 0
      %750 = vmatprep.subr.bf16.mxu0 0
      %751 = vmatpush1.bf16.msra.mxu0 0
      %752 = vmatprep.subr.bf16.mxu0 0
      %753 = vmatpush1.bf16.msra.mxu0 0
      %754 = vmatprep.subr.bf16.mxu0 0
      %755 = vmatpush1.bf16.msra.mxu0 0
      %756 = vmatprep.subr.bf16.mxu0 0
      %757 = vmatpush1.bf16.msra.mxu0 0
      %758 = vmatprep.subr.bf16.mxu0 0
      %759 = vmatpush1.bf16.msra.mxu0 0
      %760 = vmatprep.subr.bf16.mxu0 0
      %761 = vmatpush1.bf16.msra.mxu0 0
      %762 = vmatprep.subr.bf16.mxu0 0
      %763 = vmatpush1.bf16.msra.mxu0 0
      %764 = vmatprep.subr.bf16.mxu0 0
      %765 = vmatpush1.bf16.msra.mxu0 0
      %766 = vmatprep.subr.bf16.mxu0 0
      %767 = vmatpush1.bf16.msra.mxu0 0
      %768 = vmatprep.mubr.bf16.mxu0 0
      %769 = vmatmul.mubr.bf16.gmra.mrb[0].mxu0 %v121
      %v770 = vpop.f32.mrb[0].mxu0
      %v771 = vadd.f32 %v44, %v770
      %v772 = vpop.f32.mrb[0].mxu0
      %v773 = vpop.f32.mrb[0].mxu0
      %v774 = vadd.f32 %v49, %v773
      %v775 = vpop.f32.mrb[0].mxu0
      %776 = vmatprep.mubr.bf16.mxu0 0
      %777 = vmatmul.mubr.bf16.gmra.mrb[0].mxu0 %v124
      %v778 = vpop.f32.mrb[0].mxu0
      %v779 = vadd.f32 %v54, %v778
      %v780 = vpop.f32.mrb[0].mxu0
      %v781 = vpop.f32.mrb[0].mxu0
      %v782 = vadd.f32 %v59, %v781
      %v783 = vpop.f32.mrb[0].mxu0
      %784 = vdwg.mxu0
      %v785 = vtanh.pop %v771
      %v786 = vtanh.pop %v774
      %v787 = vtanh.pop %v779
      %v788 = vtanh.pop %v782
      %v789 = vpack.c.bf16 %v786, %v785
      %v790 = vpack.c.bf16 %v788, %v787
      %791 = vmatprep.subr.bf16.mxu0 0
      %792 = vmatpush1.bf16.msra.mxu0 %v789
      %793 = vmatprep.subr.bf16.mxu0 0
      %794 = vmatpush1.bf16.msra.mxu0 %v790
      %795 = vmatprep.subr.bf16.mxu0 0
      %796 = vmatpush1.bf16.msra.mxu0 0
      %797 = vmatprep.subr.bf16.mxu0 0
      %798 = vmatpush1.bf16.msra.mxu0 0
      %799 = vmatprep.subr.bf16.mxu0 0
      %800 = vmatpush1.bf16.msra.mxu0 0
      %801 = vmatprep.subr.bf16.mxu0 0
      %802 = vmatpush1.bf16.msra.mxu0 0
      %803 = vmatprep.subr.bf16.mxu0 0
      %804 = vmatpush1.bf16.msra.mxu0 0
      %805 = vmatprep.subr.bf16.mxu0 0
      %806 = vmatpush1.bf16.msra.mxu0 0
      %807 = vmatprep.subr.bf16.mxu0 0
      %808 = vmatpush1.bf16.msra.mxu0 0
      %809 = vmatprep.subr.bf16.mxu0 0
      %810 = vmatpush1.bf16.msra.mxu0 0
      %811 = vmatprep.subr.bf16.mxu0 0
      %812 = vmatpush1.bf16.msra.mxu0 0
      %813 = vmatprep.subr.bf16.mxu0 0
      %814 = vmatpush1.bf16.msra.mxu0 0
      %815 = vmatprep.subr.bf16.mxu0 0
      %816 = vmatpush1.bf16.msra.mxu0 0
      %817 = vmatprep.subr.bf16.mxu0 0
      %818 = vmatpush1.bf16.msra.mxu0 0
      %819 = vmatprep.subr.bf16.mxu0 0
      %820 = vmatpush1.bf16.msra.mxu0 0
      %821 = vmatprep.subr.bf16.mxu0 0
      %822 = vmatpush1.bf16.msra.mxu0 0
      %823 = vmatprep.mubr.bf16.mxu0 0
      %824 = vmatmul.mubr.bf16.gmra.mrb[0].mxu0 %v192
      %v825 = vpop.f32.mrb[0].mxu0
      %v826 = vadd.f32 %v68, %v825
      %v827 = vpop.f32.mrb[0].mxu0
      %v828 = vpop.f32.mrb[0].mxu0
      %v829 = vadd.f32 %v73, %v828
      %v830 = vpop.f32.mrb[0].mxu0
      %831 = vmatprep.mubr.bf16.mxu0 0
      %832 = vmatmul.mubr.bf16.gmra.mrb[0].mxu0 %v195
      %v833 = vpop.f32.mrb[0].mxu0
      %v834 = vadd.f32 %v78, %v833
      %v835 = vpop.f32.mrb[0].mxu0
      %v836 = vpop.f32.mrb[0].mxu0
      %v837 = vadd.f32 %v83, %v836
      %v838 = vpop.f32.mrb[0].mxu0
      %839 = vdwg.mxu0
      %v840 = vmul.f32 %v826, 2.0
      %v841 = vmul.f32 %v829, 2.0
      %v842 = vmul.f32 %v834, 2.0
      %v843 = vmul.f32 %v837, 2.0
      %v844 = vadd.f32 %v712, %v840
      %v845 = vadd.f32 %v715, %v841
      %v846 = vadd.f32 %v720, %v842
      %v847 = vadd.f32 %v723, %v843
      %v848 = vmul.f32 %v246, %v826
      %v849 = vmul.f32 %v246, %v829
      %v850 = vmul.f32 %v246, %v834
      %v851 = vmul.f32 %v246, %v837
      %v852 = vadd.f32 %v616, %v848
      %v853 = vadd.f32 %v617, %v849
      %v854 = vadd.f32 %v618, %v850
      %v855 = vadd.f32 %v619, %v851
      %v856 = vpack.c.bf16 %v853, %v852
      %v857 = vpack.c.bf16 %v855, %v854
      %858 = vmatprep.subr.bf16.mxu0 0
      %859 = vmatpush1.bf16.msra.mxu0 %v856
      %860 = vmatprep.subr.bf16.mxu0 0
      %861 = vmatpush1.bf16.msra.mxu0 %v857
      %862 = vmatprep.subr.bf16.mxu0 0
      %863 = vmatpush1.bf16.msra.mxu0 0
      %864 = vmatprep.subr.bf16.mxu0 0
      %865 = vmatpush1.bf16.msra.mxu0 0
      %866 = vmatprep.subr.bf16.mxu0 0
      %867 = vmatpush1.bf16.msra.mxu0 0
      %868 = vmatprep.subr.bf16.mxu0 0
      %869 = vmatpush1.bf16.msra.mxu0 0
      %870 = vmatprep.subr.bf16.mxu0 0
      %871 = vmatpush1.bf16.msra.mxu0 0
      %872 = vmatprep.subr.bf16.mxu0 0
      %873 = vmatpush1.bf16.msra.mxu0 0
      %874 = vmatprep.subr.bf16.mxu0 0
      %875 = vmatpush1.bf16.msra.mxu0 0
      %876 = vmatprep.subr.bf16.mxu0 0
      %877 = vmatpush1.bf16.msra.mxu0 0
      %878 = vmatprep.subr.bf16.mxu0 0
      %879 = vmatpush1.bf16.msra.mxu0 0
      %880 = vmatprep.subr.bf16.mxu0 0
      %881 = vmatpush1.bf16.msra.mxu0 0
      %882 = vmatprep.subr.bf16.mxu0 0
      %883 = vmatpush1.bf16.msra.mxu0 0
      %884 = vmatprep.subr.bf16.mxu0 0
      %885 = vmatpush1.bf16.msra.mxu0 0
      %886 = vmatprep.subr.bf16.mxu0 0
      %887 = vmatpush1.bf16.msra.mxu0 0
      %888 = vmatprep.subr.bf16.mxu0 0
      %889 = vmatpush1.bf16.msra.mxu0 0
      %890 = vmatprep.mubr.bf16.mxu0 0
      %891 = vmatmul.mubr.bf16.gmra.mrb[0].mxu0 %v121
      %v892 = vpop.f32.mrb[0].mxu0
      %v893 = vadd.f32 %v44, %v892
      %v894 = vpop.f32.mrb[0].mxu0
      %v895 = vpop.f32.mrb[0].mxu0
      %v896 = vadd.f32 %v49, %v895
      %v897 = vpop.f32.mrb[0].mxu0
      %898 = vmatprep.mubr.bf16.mxu0 0
      %899 = vmatmul.mubr.bf16.gmra.mrb[0].mxu0 %v124
      %v900 = vpop.f32.mrb[0].mxu0
      %v901 = vadd.f32 %v54, %v900
      %v902 = vpop.f32.mrb[0].mxu0
      %v903 = vpop.f32.mrb[0].mxu0
      %v904 = vadd.f32 %v59, %v903
      %v905 = vpop.f32.mrb[0].mxu0
      %906 = vdwg.mxu0
      %v907 = vtanh.pop %v893
      %v908 = vtanh.pop %v896
      %v909 = vtanh.pop %v901
      %v910 = vtanh.pop %v904
      %v911 = vpack.c.bf16 %v908, %v907
      %v912 = vpack.c.bf16 %v910, %v909
      %913 = vmatprep.subr.bf16.mxu0 0
      %914 = vmatpush1.bf16.msra.mxu0 %v911
      %915 = vmatprep.subr.bf16.mxu0 0
      %916 = vmatpush1.bf16.msra.mxu0 %v912
      %917 = vmatprep.subr.bf16.mxu0 0
      %918 = vmatpush1.bf16.msra.mxu0 0
      %919 = vmatprep.subr.bf16.mxu0 0
      %920 = vmatpush1.bf16.msra.mxu0 0
      %921 = vmatprep.subr.bf16.mxu0 0
      %922 = vmatpush1.bf16.msra.mxu0 0
      %923 = vmatprep.subr.bf16.mxu0 0
      %924 = vmatpush1.bf16.msra.mxu0 0
      %925 = vmatprep.subr.bf16.mxu0 0
      %926 = vmatpush1.bf16.msra.mxu0 0
      %927 = vmatprep.subr.bf16.mxu0 0
      %928 = vmatpush1.bf16.msra.mxu0 0
      %929 = vmatprep.subr.bf16.mxu0 0
      %930 = vmatpush1.bf16.msra.mxu0 0
      %931 = vmatprep.subr.bf16.mxu0 0
      %932 = vmatpush1.bf16.msra.mxu0 0
      %933 = vmatprep.subr.bf16.mxu0 0
      %934 = vmatpush1.bf16.msra.mxu0 0
      %935 = vmatprep.subr.bf16.mxu0 0
      %936 = vmatpush1.bf16.msra.mxu0 0
      %937 = vmatprep.subr.bf16.mxu0 0
      %938 = vmatpush1.bf16.msra.mxu0 0
      %939 = vmatprep.subr.bf16.mxu0 0
      %940 = vmatpush1.bf16.msra.mxu0 0
      %941 = vmatprep.subr.bf16.mxu0 0
      %942 = vmatpush1.bf16.msra.mxu0 0
      %943 = vmatprep.subr.bf16.mxu0 0
      %944 = vmatpush1.bf16.msra.mxu0 0
      %945 = vmatprep.mubr.bf16.mxu0 0
      %946 = vmatmul.mubr.bf16.gmra.mrb[0].mxu0 %v192
      %v947 = vpop.f32.mrb[0].mxu0
      %v948 = vadd.f32 %v68, %v947
      %v949 = vpop.f32.mrb[0].mxu0
      %v950 = vpop.f32.mrb[0].mxu0
      %v951 = vadd.f32 %v73, %v950
      %v952 = vpop.f32.mrb[0].mxu0
      %953 = vmatprep.mubr.bf16.mxu0 0
      %954 = vmatmul.mubr.bf16.gmra.mrb[0].mxu0 %v195
      %v955 = vpop.f32.mrb[0].mxu0
      %v956 = vadd.f32 %v78, %v955
      %v957 = vpop.f32.mrb[0].mxu0
      %v958 = vpop.f32.mrb[0].mxu0
      %v959 = vadd.f32 %v83, %v958
      %v960 = vpop.f32.mrb[0].mxu0
      %961 = vdwg.mxu0
      %v962 = vmul.f32 %v948, 2.0
      %v963 = vmul.f32 %v951, 2.0
      %v964 = vmul.f32 %v956, 2.0
      %v965 = vmul.f32 %v959, 2.0
      %v966 = vadd.f32 %v844, %v962
      %v967 = vadd.f32 %v845, %v963
      %v968 = vadd.f32 %v846, %v964
      %v969 = vadd.f32 %v847, %v965
      %v970 = vmul.f32 %v491, %v948
      %v971 = vmul.f32 %v491, %v951
      %v972 = vmul.f32 %v491, %v956
      %v973 = vmul.f32 %v491, %v959
      %v974 = vadd.f32 %v616, %v970
      %v975 = vadd.f32 %v617, %v971
      %v976 = vadd.f32 %v618, %v972
      %v977 = vadd.f32 %v619, %v973
      %v978 = vpack.c.bf16 %v975, %v974
      %v979 = vpack.c.bf16 %v977, %v976
      %980 = vmatprep.subr.bf16.mxu0 0
      %981 = vmatpush1.bf16.msra.mxu0 %v978
      %982 = vmatprep.subr.bf16.mxu0 0
      %983 = vmatpush1.bf16.msra.mxu0 %v979
      %984 = vmatprep.subr.bf16.mxu0 0
      %985 = vmatpush1.bf16.msra.mxu0 0
      %986 = vmatprep.subr.bf16.mxu0 0
      %987 = vmatpush1.bf16.msra.mxu0 0
      %988 = vmatprep.subr.bf16.mxu0 0
      %989 = vmatpush1.bf16.msra.mxu0 0
      %990 = vmatprep.subr.bf16.mxu0 0
      %991 = vmatpush1.bf16.msra.mxu0 0
      %992 = vmatprep.subr.bf16.mxu0 0
      %993 = vmatpush1.bf16.msra.mxu0 0
      %994 = vmatprep.subr.bf16.mxu0 0
      %995 = vmatpush1.bf16.msra.mxu0 0
      %996 = vmatprep.subr.bf16.mxu0 0
      %997 = vmatpush1.bf16.msra.mxu0 0
      %998 = vmatprep.subr.bf16.mxu0 0
      %999 = vmatpush1.bf16.msra.mxu0 0
      %1000 = vmatprep.subr.bf16.mxu0 0
      %1001 = vmatpush1.bf16.msra.mxu0 0
      %1002 = vmatprep.subr.bf16.mxu0 0
      %1003 = vmatpush1.bf16.msra.mxu0 0
      %1004 = vmatprep.subr.bf16.mxu0 0
      %1005 = vmatpush1.bf16.msra.mxu0 0
      %1006 = vmatprep.subr.bf16.mxu0 0
      %1007 = vmatpush1.bf16.msra.mxu0 0
      %1008 = vmatprep.subr.bf16.mxu0 0
      %1009 = vmatpush1.bf16.msra.mxu0 0
      %1010 = vmatprep.subr.bf16.mxu0 0
      %1011 = vmatpush1.bf16.msra.mxu0 0
      %1012 = vmatprep.mubr.bf16.mxu0 0
      %1013 = vmatmul.mubr.bf16.gmra.mrb[0].mxu0 %v121
      %v1014 = vpop.f32.mrb[0].mxu0
      %v1015 = vadd.f32 %v44, %v1014
      %v1016 = vpop.f32.mrb[0].mxu0
      %v1017 = vpop.f32.mrb[0].mxu0
      %v1018 = vadd.f32 %v49, %v1017
      %v1019 = vpop.f32.mrb[0].mxu0
      %1020 = vmatprep.mubr.bf16.mxu0 0
      %1021 = vmatmul.mubr.bf16.gmra.mrb[0].mxu0 %v124
      %v1022 = vpop.f32.mrb[0].mxu0
      %v1023 = vadd.f32 %v54, %v1022
      %v1024 = vpop.f32.mrb[0].mxu0
      %v1025 = vpop.f32.mrb[0].mxu0
      %v1026 = vadd.f32 %v59, %v1025
      %v1027 = vpop.f32.mrb[0].mxu0
      %1028 = vdwg.mxu0
      %v1029 = vtanh.pop %v1015
      %v1030 = vtanh.pop %v1018
      %v1031 = vtanh.pop %v1023
      %v1032 = vtanh.pop %v1026
      %v1033 = vpack.c.bf16 %v1030, %v1029
      %v1034 = vpack.c.bf16 %v1032, %v1031
      %1035 = vmatprep.subr.bf16.mxu0 0
      %1036 = vmatpush1.bf16.msra.mxu0 %v1033
      %1037 = vmatprep.subr.bf16.mxu0 0
      %1038 = vmatpush1.bf16.msra.mxu0 %v1034
      %1039 = vmatprep.subr.bf16.mxu0 0
      %1040 = vmatpush1.bf16.msra.mxu0 0
      %1041 = vmatprep.subr.bf16.mxu0 0
      %1042 = vmatpush1.bf16.msra.mxu0 0
      %1043 = vmatprep.subr.bf16.mxu0 0
      %1044 = vmatpush1.bf16.msra.mxu0 0
      %1045 = vmatprep.subr.bf16.mxu0 0
      %1046 = vmatpush1.bf16.msra.mxu0 0
      %1047 = vmatprep.subr.bf16.mxu0 0
      %1048 = vmatpush1.bf16.msra.mxu0 0
      %1049 = vmatprep.subr.bf16.mxu0 0
      %1050 = vmatpush1.bf16.msra.mxu0 0
      %1051 = vmatprep.subr.bf16.mxu0 0
      %1052 = vmatpush1.bf16.msra.mxu0 0
      %1053 = vmatprep.subr.bf16.mxu0 0
      %1054 = vmatpush1.bf16.msra.mxu0 0
      %1055 = vmatprep.subr.bf16.mxu0 0
      %1056 = vmatpush1.bf16.msra.mxu0 0
      %1057 = vmatprep.subr.bf16.mxu0 0
      %1058 = vmatpush1.bf16.msra.mxu0 0
      %1059 = vmatprep.subr.bf16.mxu0 0
      %1060 = vmatpush1.bf16.msra.mxu0 0
      %1061 = vmatprep.subr.bf16.mxu0 0
      %1062 = vmatpush1.bf16.msra.mxu0 0
      %1063 = vmatprep.subr.bf16.mxu0 0
      %1064 = vmatpush1.bf16.msra.mxu0 0
      %1065 = vmatprep.subr.bf16.mxu0 0
      %1066 = vmatpush1.bf16.msra.mxu0 0
      %1067 = vmatprep.mubr.bf16.mxu0 0
      %1068 = vmatmul.mubr.bf16.gmra.mrb[0].mxu0 %v192
      %v1069 = vpop.f32.mrb[0].mxu0
      %v1070 = vadd.f32 %v68, %v1069
      %v1071 = vpop.f32.mrb[0].mxu0
      %v1072 = vpop.f32.mrb[0].mxu0
      %v1073 = vadd.f32 %v73, %v1072
      %v1074 = vpop.f32.mrb[0].mxu0
      %1075 = vmatprep.mubr.bf16.mxu0 0
      %1076 = vmatmul.mubr.bf16.gmra.mrb[0].mxu0 %v195
      %v1077 = vpop.f32.mrb[0].mxu0
      %v1078 = vadd.f32 %v78, %v1077
      %v1079 = vpop.f32.mrb[0].mxu0
      %v1080 = vpop.f32.mrb[0].mxu0
      %v1081 = vadd.f32 %v83, %v1080
      %v1082 = vpop.f32.mrb[0].mxu0
      %1083 = vdwg.mxu0
      %v1084 = vadd.f32 %v966, %v1070
      %v1085 = vadd.f32 %v967, %v1073
      %v1086 = vadd.f32 %v968, %v1078
      %v1087 = vadd.f32 %v969, %v1081
      %v1088 = vmul.f32 %v611, %v1084
      %v1089 = vmul.f32 %v611, %v1085
      %v1090 = vmul.f32 %v611, %v1086
      %v1091 = vmul.f32 %v611, %v1087
      %v1092 = vadd.f32 %v616, %v1088
      %v1093 = vadd.f32 %v617, %v1089
      %v1094 = vadd.f32 %v618, %v1090
      %v1095 = vadd.f32 %v619, %v1091
      %v1096 = vpack.c.bf16 %v1093, %v1092
      %v1097 = vpack.c.bf16 %v1095, %v1094
      %1098 = vmatprep.subr.bf16.mxu0 0
      %1099 = vmatpush1.bf16.msra.mxu0 %v1096
      %1100 = vmatprep.subr.bf16.mxu0 0
      %1101 = vmatpush1.bf16.msra.mxu0 %v1097
      %1102 = vmatprep.subr.bf16.mxu0 0
      %1103 = vmatpush1.bf16.msra.mxu0 0
      %1104 = vmatprep.subr.bf16.mxu0 0
      %1105 = vmatpush1.bf16.msra.mxu0 0
      %1106 = vmatprep.subr.bf16.mxu0 0
      %1107 = vmatpush1.bf16.msra.mxu0 0
      %1108 = vmatprep.subr.bf16.mxu0 0
      %1109 = vmatpush1.bf16.msra.mxu0 0
      %1110 = vmatprep.subr.bf16.mxu0 0
      %1111 = vmatpush1.bf16.msra.mxu0 0
      %1112 = vmatprep.subr.bf16.mxu0 0
      %1113 = vmatpush1.bf16.msra.mxu0 0
      %1114 = vmatprep.subr.bf16.mxu0 0
      %1115 = vmatpush1.bf16.msra.mxu0 0
      %1116 = vmatprep.subr.bf16.mxu0 0
      %1117 = vmatpush1.bf16.msra.mxu0 0
      %1118 = vmatprep.subr.bf16.mxu0 0
      %1119 = vmatpush1.bf16.msra.mxu0 0
      %1120 = vmatprep.subr.bf16.mxu0 0
      %1121 = vmatpush1.bf16.msra.mxu0 0
      %1122 = vmatprep.subr.bf16.mxu0 0
      %1123 = vmatpush1.bf16.msra.mxu0 0
      %1124 = vmatprep.subr.bf16.mxu0 0
      %1125 = vmatpush1.bf16.msra.mxu0 0
      %1126 = vmatprep.subr.bf16.mxu0 0
      %1127 = vmatpush1.bf16.msra.mxu0 0
      %1128 = vmatprep.subr.bf16.mxu0 0
      %1129 = vmatpush1.bf16.msra.mxu0 0
      %1130 = vmatprep.mubr.bf16.mxu0 0
      %1131 = vmatmul.mubr.bf16.gmra.mrb[0].mxu0 %v121
      %v1132 = vpop.f32.mrb[0].mxu0
      %v1133 = vadd.f32 %v44, %v1132
      %v1134 = vpop.f32.mrb[0].mxu0
      %v1135 = vpop.f32.mrb[0].mxu0
      %v1136 = vadd.f32 %v49, %v1135
      %v1137 = vpop.f32.mrb[0].mxu0
      %1138 = vmatprep.mubr.bf16.mxu0 0
      %1139 = vmatmul.mubr.bf16.gmra.mrb[0].mxu0 %v124
      %v1140 = vpop.f32.mrb[0].mxu0
      %v1141 = vadd.f32 %v54, %v1140
      %v1142 = vpop.f32.mrb[0].mxu0
      %v1143 = vpop.f32.mrb[0].mxu0
      %v1144 = vadd.f32 %v59, %v1143
      %v1145 = vpop.f32.mrb[0].mxu0
      %1146 = vdwg.mxu0
      %v1147 = vtanh.pop %v1133
      %v1148 = vtanh.pop %v1136
      %v1149 = vtanh.pop %v1141
      %v1150 = vtanh.pop %v1144
      %v1151 = vpack.c.bf16 %v1148, %v1147
      %v1152 = vpack.c.bf16 %v1150, %v1149
      %1153 = vmatprep.subr.bf16.mxu0 0
      %1154 = vmatpush1.bf16.msra.mxu0 %v1151
      %1155 = vmatprep.subr.bf16.mxu0 0
      %1156 = vmatpush1.bf16.msra.mxu0 %v1152
      %1157 = vmatprep.subr.bf16.mxu0 0
      %1158 = vmatpush1.bf16.msra.mxu0 0
      %1159 = vmatprep.subr.bf16.mxu0 0
      %1160 = vmatpush1.bf16.msra.mxu0 0
      %1161 = vmatprep.subr.bf16.mxu0 0
      %1162 = vmatpush1.bf16.msra.mxu0 0
      %1163 = vmatprep.subr.bf16.mxu0 0
      %1164 = vmatpush1.bf16.msra.mxu0 0
      %1165 = vmatprep.subr.bf16.mxu0 0
      %1166 = vmatpush1.bf16.msra.mxu0 0
      %1167 = vmatprep.subr.bf16.mxu0 0
      %1168 = vmatpush1.bf16.msra.mxu0 0
      %1169 = vmatprep.subr.bf16.mxu0 0
      %1170 = vmatpush1.bf16.msra.mxu0 0
      %1171 = vmatprep.subr.bf16.mxu0 0
      %1172 = vmatpush1.bf16.msra.mxu0 0
      %1173 = vmatprep.subr.bf16.mxu0 0
      %1174 = vmatpush1.bf16.msra.mxu0 0
      %1175 = vmatprep.subr.bf16.mxu0 0
      %1176 = vmatpush1.bf16.msra.mxu0 0
      %1177 = vmatprep.subr.bf16.mxu0 0
      %1178 = vmatpush1.bf16.msra.mxu0 0
      %1179 = vmatprep.subr.bf16.mxu0 0
      %1180 = vmatpush1.bf16.msra.mxu0 0
      %1181 = vmatprep.subr.bf16.mxu0 0
      %1182 = vmatpush1.bf16.msra.mxu0 0
      %1183 = vmatprep.subr.bf16.mxu0 0
      %1184 = vmatpush1.bf16.msra.mxu0 0
      %1185 = vmatprep.mubr.bf16.mxu0 0
      %1186 = vmatmul.mubr.bf16.gmra.mrb[0].mxu0 %v192
      %v1187 = vpop.f32.mrb[0].mxu0
      %v1188 = vadd.f32 %v68, %v1187
      %v1189 = vpop.f32.mrb[0].mxu0
      %v1190 = vpop.f32.mrb[0].mxu0
      %v1191 = vadd.f32 %v73, %v1190
      %v1192 = vpop.f32.mrb[0].mxu0
      %1193 = vmatprep.mubr.bf16.mxu0 0
      %1194 = vmatmul.mubr.bf16.gmra.mrb[0].mxu0 %v195
      %v1195 = vpop.f32.mrb[0].mxu0
      %v1196 = vadd.f32 %v78, %v1195
      %v1197 = vpop.f32.mrb[0].mxu0
      %v1198 = vpop.f32.mrb[0].mxu0
      %v1199 = vadd.f32 %v83, %v1198
      %v1200 = vpop.f32.mrb[0].mxu0
      %1201 = vdwg.mxu0
      %v1202 = vmul.f32 %v246, %v1188
      %v1203 = vmul.f32 %v246, %v1191
      %v1204 = vmul.f32 %v246, %v1196
      %v1205 = vmul.f32 %v246, %v1199
      %v1206 = vadd.f32 %v1092, %v1202
      %v1207 = vadd.f32 %v1093, %v1203
      %v1208 = vadd.f32 %v1094, %v1204
      %v1209 = vadd.f32 %v1095, %v1205
      %v1210 = vpack.c.bf16 %v1207, %v1206
      %v1211 = vpack.c.bf16 %v1209, %v1208
      %1212 = vmatprep.subr.bf16.mxu0 0
      %1213 = vmatpush1.bf16.msra.mxu0 %v1210
      %1214 = vmatprep.subr.bf16.mxu0 0
      %1215 = vmatpush1.bf16.msra.mxu0 %v1211
      %1216 = vmatprep.subr.bf16.mxu0 0
      %1217 = vmatpush1.bf16.msra.mxu0 0
      %1218 = vmatprep.subr.bf16.mxu0 0
      %1219 = vmatpush1.bf16.msra.mxu0 0
      %1220 = vmatprep.subr.bf16.mxu0 0
      %1221 = vmatpush1.bf16.msra.mxu0 0
      %1222 = vmatprep.subr.bf16.mxu0 0
      %1223 = vmatpush1.bf16.msra.mxu0 0
      %1224 = vmatprep.subr.bf16.mxu0 0
      %1225 = vmatpush1.bf16.msra.mxu0 0
      %1226 = vmatprep.subr.bf16.mxu0 0
      %1227 = vmatpush1.bf16.msra.mxu0 0
      %1228 = vmatprep.subr.bf16.mxu0 0
      %1229 = vmatpush1.bf16.msra.mxu0 0
      %1230 = vmatprep.subr.bf16.mxu0 0
      %1231 = vmatpush1.bf16.msra.mxu0 0
      %1232 = vmatprep.subr.bf16.mxu0 0
      %1233 = vmatpush1.bf16.msra.mxu0 0
      %1234 = vmatprep.subr.bf16.mxu0 0
      %1235 = vmatpush1.bf16.msra.mxu0 0
      %1236 = vmatprep.subr.bf16.mxu0 0
      %1237 = vmatpush1.bf16.msra.mxu0 0
      %1238 = vmatprep.subr.bf16.mxu0 0
      %1239 = vmatpush1.bf16.msra.mxu0 0
      %1240 = vmatprep.subr.bf16.mxu0 0
      %1241 = vmatpush1.bf16.msra.mxu0 0
      %1242 = vmatprep.subr.bf16.mxu0 0
      %1243 = vmatpush1.bf16.msra.mxu0 0
      %1244 = vmatprep.mubr.bf16.mxu0 0
      %1245 = vmatmul.mubr.bf16.gmra.mrb[0].mxu0 %v121
      %v1246 = vpop.f32.mrb[0].mxu0
      %v1247 = vadd.f32 %v44, %v1246
      %v1248 = vpop.f32.mrb[0].mxu0
      %v1249 = vpop.f32.mrb[0].mxu0
      %v1250 = vadd.f32 %v49, %v1249
      %v1251 = vpop.f32.mrb[0].mxu0
      %1252 = vmatprep.mubr.bf16.mxu0 0
      %1253 = vmatmul.mubr.bf16.gmra.mrb[0].mxu0 %v124
      %v1254 = vpop.f32.mrb[0].mxu0
      %v1255 = vadd.f32 %v54, %v1254
      %v1256 = vpop.f32.mrb[0].mxu0
      %v1257 = vpop.f32.mrb[0].mxu0
      %v1258 = vadd.f32 %v59, %v1257
      %v1259 = vpop.f32.mrb[0].mxu0
      %1260 = vdwg.mxu0
      %v1261 = vtanh.pop %v1247
      %v1262 = vtanh.pop %v1250
      %v1263 = vtanh.pop %v1255
      %v1264 = vtanh.pop %v1258
      %v1265 = vpack.c.bf16 %v1262, %v1261
      %v1266 = vpack.c.bf16 %v1264, %v1263
      %1267 = vmatprep.subr.bf16.mxu0 0
      %1268 = vmatpush1.bf16.msra.mxu0 %v1265
      %1269 = vmatprep.subr.bf16.mxu0 0
      %1270 = vmatpush1.bf16.msra.mxu0 %v1266
      %1271 = vmatprep.subr.bf16.mxu0 0
      %1272 = vmatpush1.bf16.msra.mxu0 0
      %1273 = vmatprep.subr.bf16.mxu0 0
      %1274 = vmatpush1.bf16.msra.mxu0 0
      %1275 = vmatprep.subr.bf16.mxu0 0
      %1276 = vmatpush1.bf16.msra.mxu0 0
      %1277 = vmatprep.subr.bf16.mxu0 0
      %1278 = vmatpush1.bf16.msra.mxu0 0
      %1279 = vmatprep.subr.bf16.mxu0 0
      %1280 = vmatpush1.bf16.msra.mxu0 0
      %1281 = vmatprep.subr.bf16.mxu0 0
      %1282 = vmatpush1.bf16.msra.mxu0 0
      %1283 = vmatprep.subr.bf16.mxu0 0
      %1284 = vmatpush1.bf16.msra.mxu0 0
      %1285 = vmatprep.subr.bf16.mxu0 0
      %1286 = vmatpush1.bf16.msra.mxu0 0
      %1287 = vmatprep.subr.bf16.mxu0 0
      %1288 = vmatpush1.bf16.msra.mxu0 0
      %1289 = vmatprep.subr.bf16.mxu0 0
      %1290 = vmatpush1.bf16.msra.mxu0 0
      %1291 = vmatprep.subr.bf16.mxu0 0
      %1292 = vmatpush1.bf16.msra.mxu0 0
      %1293 = vmatprep.subr.bf16.mxu0 0
      %1294 = vmatpush1.bf16.msra.mxu0 0
      %1295 = vmatprep.subr.bf16.mxu0 0
      %1296 = vmatpush1.bf16.msra.mxu0 0
      %1297 = vmatprep.subr.bf16.mxu0 0
      %1298 = vmatpush1.bf16.msra.mxu0 0
      %1299 = vmatprep.mubr.bf16.mxu0 0
      %1300 = vmatmul.mubr.bf16.gmra.mrb[0].mxu0 %v192
      %v1301 = vpop.f32.mrb[0].mxu0
      %v1302 = vadd.f32 %v68, %v1301
      %v1303 = vpop.f32.mrb[0].mxu0
      %v1304 = vpop.f32.mrb[0].mxu0
      %v1305 = vadd.f32 %v73, %v1304
      %v1306 = vpop.f32.mrb[0].mxu0
      %1307 = vmatprep.mubr.bf16.mxu0 0
      %1308 = vmatmul.mubr.bf16.gmra.mrb[0].mxu0 %v195
      %v1309 = vpop.f32.mrb[0].mxu0
      %v1310 = vadd.f32 %v78, %v1309
      %v1311 = vpop.f32.mrb[0].mxu0
      %v1312 = vpop.f32.mrb[0].mxu0
      %v1313 = vadd.f32 %v83, %v1312
      %v1314 = vpop.f32.mrb[0].mxu0
      %1315 = vdwg.mxu0
      %v1316 = vmul.f32 %v1302, 2.0
      %v1317 = vmul.f32 %v1305, 2.0
      %v1318 = vmul.f32 %v1310, 2.0
      %v1319 = vmul.f32 %v1313, 2.0
      %v1320 = vadd.f32 %v1188, %v1316
      %v1321 = vadd.f32 %v1191, %v1317
      %v1322 = vadd.f32 %v1196, %v1318
      %v1323 = vadd.f32 %v1199, %v1319
      %v1324 = vmul.f32 %v246, %v1302
      %v1325 = vmul.f32 %v246, %v1305
      %v1326 = vmul.f32 %v246, %v1310
      %v1327 = vmul.f32 %v246, %v1313
      %v1328 = vadd.f32 %v1092, %v1324
      %v1329 = vadd.f32 %v1093, %v1325
      %v1330 = vadd.f32 %v1094, %v1326
      %v1331 = vadd.f32 %v1095, %v1327
      %v1332 = vpack.c.bf16 %v1329, %v1328
      %v1333 = vpack.c.bf16 %v1331, %v1330
      %1334 = vmatprep.subr.bf16.mxu0 0
      %1335 = vmatpush1.bf16.msra.mxu0 %v1332
      %1336 = vmatprep.subr.bf16.mxu0 0
      %1337 = vmatpush1.bf16.msra.mxu0 %v1333
      %1338 = vmatprep.subr.bf16.mxu0 0
      %1339 = vmatpush1.bf16.msra.mxu0 0
      %1340 = vmatprep.subr.bf16.mxu0 0
      %1341 = vmatpush1.bf16.msra.mxu0 0
      %1342 = vmatprep.subr.bf16.mxu0 0
      %1343 = vmatpush1.bf16.msra.mxu0 0
      %1344 = vmatprep.subr.bf16.mxu0 0
      %1345 = vmatpush1.bf16.msra.mxu0 0
      %1346 = vmatprep.subr.bf16.mxu0 0
      %1347 = vmatpush1.bf16.msra.mxu0 0
      %1348 = vmatprep.subr.bf16.mxu0 0
      %1349 = vmatpush1.bf16.msra.mxu0 0
      %1350 = vmatprep.subr.bf16.mxu0 0
      %1351 = vmatpush1.bf16.msra.mxu0 0
      %1352 = vmatprep.subr.bf16.mxu0 0
      %1353 = vmatpush1.bf16.msra.mxu0 0
      %1354 = vmatprep.subr.bf16.mxu0 0
      %1355 = vmatpush1.bf16.msra.mxu0 0
      %1356 = vmatprep.subr.bf16.mxu0 0
      %1357 = vmatpush1.bf16.msra.mxu0 0
      %1358 = vmatprep.subr.bf16.mxu0 0
      %1359 = vmatpush1.bf16.msra.mxu0 0
      %1360 = vmatprep.subr.bf16.mxu0 0
      %1361 = vmatpush1.bf16.msra.mxu0 0
      %1362 = vmatprep.subr.bf16.mxu0 0
      %1363 = vmatpush1.bf16.msra.mxu0 0
      %1364 = vmatprep.subr.bf16.mxu0 0
      %1365 = vmatpush1.bf16.msra.mxu0 0
      %1366 = vmatprep.mubr.bf16.mxu0 0
      %1367 = vmatmul.mubr.bf16.gmra.mrb[0].mxu0 %v121
      %v1368 = vpop.f32.mrb[0].mxu0
      %v1369 = vadd.f32 %v44, %v1368
      %v1370 = vpop.f32.mrb[0].mxu0
      %v1371 = vpop.f32.mrb[0].mxu0
      %v1372 = vadd.f32 %v49, %v1371
      %v1373 = vpop.f32.mrb[0].mxu0
      %1374 = vmatprep.mubr.bf16.mxu0 0
      %1375 = vmatmul.mubr.bf16.gmra.mrb[0].mxu0 %v124
      %v1376 = vpop.f32.mrb[0].mxu0
      %v1377 = vadd.f32 %v54, %v1376
      %v1378 = vpop.f32.mrb[0].mxu0
      %v1379 = vpop.f32.mrb[0].mxu0
      %v1380 = vadd.f32 %v59, %v1379
      %v1381 = vpop.f32.mrb[0].mxu0
      %1382 = vdwg.mxu0
      %v1383 = vtanh.pop %v1369
      %v1384 = vtanh.pop %v1372
      %v1385 = vtanh.pop %v1377
      %v1386 = vtanh.pop %v1380
      %v1387 = vpack.c.bf16 %v1384, %v1383
      %v1388 = vpack.c.bf16 %v1386, %v1385
      %1389 = vmatprep.subr.bf16.mxu0 0
      %1390 = vmatpush1.bf16.msra.mxu0 %v1387
      %1391 = vmatprep.subr.bf16.mxu0 0
      %1392 = vmatpush1.bf16.msra.mxu0 %v1388
      %1393 = vmatprep.subr.bf16.mxu0 0
      %1394 = vmatpush1.bf16.msra.mxu0 0
      %1395 = vmatprep.subr.bf16.mxu0 0
      %1396 = vmatpush1.bf16.msra.mxu0 0
      %1397 = vmatprep.subr.bf16.mxu0 0
      %1398 = vmatpush1.bf16.msra.mxu0 0
      %1399 = vmatprep.subr.bf16.mxu0 0
      %1400 = vmatpush1.bf16.msra.mxu0 0
      %1401 = vmatprep.subr.bf16.mxu0 0
      %1402 = vmatpush1.bf16.msra.mxu0 0
      %1403 = vmatprep.subr.bf16.mxu0 0
      %1404 = vmatpush1.bf16.msra.mxu0 0
      %1405 = vmatprep.subr.bf16.mxu0 0
      %1406 = vmatpush1.bf16.msra.mxu0 0
      %1407 = vmatprep.subr.bf16.mxu0 0
      %1408 = vmatpush1.bf16.msra.mxu0 0
      %1409 = vmatprep.subr.bf16.mxu0 0
      %1410 = vmatpush1.bf16.msra.mxu0 0
      %1411 = vmatprep.subr.bf16.mxu0 0
      %1412 = vmatpush1.bf16.msra.mxu0 0
      %1413 = vmatprep.subr.bf16.mxu0 0
      %1414 = vmatpush1.bf16.msra.mxu0 0
      %1415 = vmatprep.subr.bf16.mxu0 0
      %1416 = vmatpush1.bf16.msra.mxu0 0
      %1417 = vmatprep.subr.bf16.mxu0 0
      %1418 = vmatpush1.bf16.msra.mxu0 0
      %1419 = vmatprep.subr.bf16.mxu0 0
      %1420 = vmatpush1.bf16.msra.mxu0 0
      %1421 = vmatprep.mubr.bf16.mxu0 0
      %1422 = vmatmul.mubr.bf16.gmra.mrb[0].mxu0 %v192
      %v1423 = vpop.f32.mrb[0].mxu0
      %v1424 = vadd.f32 %v68, %v1423
      %v1425 = vpop.f32.mrb[0].mxu0
      %v1426 = vpop.f32.mrb[0].mxu0
      %v1427 = vadd.f32 %v73, %v1426
      %v1428 = vpop.f32.mrb[0].mxu0
      %1429 = vmatprep.mubr.bf16.mxu0 0
      %1430 = vmatmul.mubr.bf16.gmra.mrb[0].mxu0 %v195
      %v1431 = vpop.f32.mrb[0].mxu0
      %v1432 = vadd.f32 %v78, %v1431
      %v1433 = vpop.f32.mrb[0].mxu0
      %v1434 = vpop.f32.mrb[0].mxu0
      %v1435 = vadd.f32 %v83, %v1434
      %v1436 = vpop.f32.mrb[0].mxu0
      %1437 = vdwg.mxu0
      %v1438 = vmul.f32 %v1424, 2.0
      %v1439 = vmul.f32 %v1427, 2.0
      %v1440 = vmul.f32 %v1432, 2.0
      %v1441 = vmul.f32 %v1435, 2.0
      %v1442 = vadd.f32 %v1320, %v1438
      %v1443 = vadd.f32 %v1321, %v1439
      %v1444 = vadd.f32 %v1322, %v1440
      %v1445 = vadd.f32 %v1323, %v1441
      %v1446 = vmul.f32 %v491, %v1424
      %v1447 = vmul.f32 %v491, %v1427
      %v1448 = vmul.f32 %v491, %v1432
      %v1449 = vmul.f32 %v491, %v1435
      %v1450 = vadd.f32 %v1092, %v1446
      %v1451 = vadd.f32 %v1093, %v1447
      %v1452 = vadd.f32 %v1094, %v1448
      %v1453 = vadd.f32 %v1095, %v1449
      %v1454 = vpack.c.bf16 %v1451, %v1450
      %v1455 = vpack.c.bf16 %v1453, %v1452
      %1456 = vmatprep.subr.bf16.mxu0 0
      %1457 = vmatpush1.bf16.msra.mxu0 %v1454
      %1458 = vmatprep.subr.bf16.mxu0 0
      %1459 = vmatpush1.bf16.msra.mxu0 %v1455
      %1460 = vmatprep.subr.bf16.mxu0 0
      %1461 = vmatpush1.bf16.msra.mxu0 0
      %1462 = vmatprep.subr.bf16.mxu0 0
      %1463 = vmatpush1.bf16.msra.mxu0 0
      %1464 = vmatprep.subr.bf16.mxu0 0
      %1465 = vmatpush1.bf16.msra.mxu0 0
      %1466 = vmatprep.subr.bf16.mxu0 0
      %1467 = vmatpush1.bf16.msra.mxu0 0
      %1468 = vmatprep.subr.bf16.mxu0 0
      %1469 = vmatpush1.bf16.msra.mxu0 0
      %1470 = vmatprep.subr.bf16.mxu0 0
      %1471 = vmatpush1.bf16.msra.mxu0 0
      %1472 = vmatprep.subr.bf16.mxu0 0
      %1473 = vmatpush1.bf16.msra.mxu0 0
      %1474 = vmatprep.subr.bf16.mxu0 0
      %1475 = vmatpush1.bf16.msra.mxu0 0
      %1476 = vmatprep.subr.bf16.mxu0 0
      %1477 = vmatpush1.bf16.msra.mxu0 0
      %1478 = vmatprep.subr.bf16.mxu0 0
      %1479 = vmatpush1.bf16.msra.mxu0 0
      %1480 = vmatprep.subr.bf16.mxu0 0
      %1481 = vmatpush1.bf16.msra.mxu0 0
      %1482 = vmatprep.subr.bf16.mxu0 0
      %1483 = vmatpush1.bf16.msra.mxu0 0
      %1484 = vmatprep.subr.bf16.mxu0 0
      %1485 = vmatpush1.bf16.msra.mxu0 0
      %1486 = vmatprep.subr.bf16.mxu0 0
      %1487 = vmatpush1.bf16.msra.mxu0 0
      %1488 = vmatprep.mubr.bf16.mxu0 0
      %1489 = vmatmul.mubr.bf16.gmra.mrb[0].mxu0 %v121
      %v1490 = vpop.f32.mrb[0].mxu0
      %v1491 = vadd.f32 %v44, %v1490
      %v1492 = vpop.f32.mrb[0].mxu0
      %v1493 = vpop.f32.mrb[0].mxu0
      %v1494 = vadd.f32 %v49, %v1493
      %v1495 = vpop.f32.mrb[0].mxu0
      %1496 = vmatprep.mubr.bf16.mxu0 0
      %1497 = vmatmul.mubr.bf16.gmra.mrb[0].mxu0 %v124
      %v1498 = vpop.f32.mrb[0].mxu0
      %v1499 = vadd.f32 %v54, %v1498
      %v1500 = vpop.f32.mrb[0].mxu0
      %v1501 = vpop.f32.mrb[0].mxu0
      %v1502 = vadd.f32 %v59, %v1501
      %v1503 = vpop.f32.mrb[0].mxu0
      %1504 = vdwg.mxu0
      %v1505 = vtanh.pop %v1491
      %v1506 = vtanh.pop %v1494
      %v1507 = vtanh.pop %v1499
      %v1508 = vtanh.pop %v1502
      %v1509 = vpack.c.bf16 %v1506, %v1505
      %v1510 = vpack.c.bf16 %v1508, %v1507
      %1511 = vmatprep.subr.bf16.mxu0 0
      %1512 = vmatpush1.bf16.msra.mxu0 %v1509
      %1513 = vmatprep.subr.bf16.mxu0 0
      %1514 = vmatpush1.bf16.msra.mxu0 %v1510
      %1515 = vmatprep.subr.bf16.mxu0 0
      %1516 = vmatpush1.bf16.msra.mxu0 0
      %1517 = vmatprep.subr.bf16.mxu0 0
      %1518 = vmatpush1.bf16.msra.mxu0 0
      %1519 = vmatprep.subr.bf16.mxu0 0
      %1520 = vmatpush1.bf16.msra.mxu0 0
      %1521 = vmatprep.subr.bf16.mxu0 0
      %1522 = vmatpush1.bf16.msra.mxu0 0
      %1523 = vmatprep.subr.bf16.mxu0 0
      %1524 = vmatpush1.bf16.msra.mxu0 0
      %1525 = vmatprep.subr.bf16.mxu0 0
      %1526 = vmatpush1.bf16.msra.mxu0 0
      %1527 = vmatprep.subr.bf16.mxu0 0
      %1528 = vmatpush1.bf16.msra.mxu0 0
      %1529 = vmatprep.subr.bf16.mxu0 0
      %1530 = vmatpush1.bf16.msra.mxu0 0
      %1531 = vmatprep.subr.bf16.mxu0 0
      %1532 = vmatpush1.bf16.msra.mxu0 0
      %1533 = vmatprep.subr.bf16.mxu0 0
      %1534 = vmatpush1.bf16.msra.mxu0 0
      %1535 = vmatprep.subr.bf16.mxu0 0
      %1536 = vmatpush1.bf16.msra.mxu0 0
      %1537 = vmatprep.subr.bf16.mxu0 0
      %1538 = vmatpush1.bf16.msra.mxu0 0
      %1539 = vmatprep.subr.bf16.mxu0 0
      %1540 = vmatpush1.bf16.msra.mxu0 0
      %1541 = vmatprep.subr.bf16.mxu0 0
      %1542 = vmatpush1.bf16.msra.mxu0 0
      %1543 = vmatprep.mubr.bf16.mxu0 0
      %1544 = vmatmul.mubr.bf16.gmra.mrb[0].mxu0 %v192
      %v1545 = vpop.f32.mrb[0].mxu0
      %v1546 = vadd.f32 %v68, %v1545
      %v1547 = vpop.f32.mrb[0].mxu0
      %v1548 = vpop.f32.mrb[0].mxu0
      %v1549 = vadd.f32 %v73, %v1548
      %v1550 = vpop.f32.mrb[0].mxu0
      %1551 = vmatprep.mubr.bf16.mxu0 0
      %1552 = vmatmul.mubr.bf16.gmra.mrb[0].mxu0 %v195
      %v1553 = vpop.f32.mrb[0].mxu0
      %v1554 = vadd.f32 %v78, %v1553
      %v1555 = vpop.f32.mrb[0].mxu0
      %v1556 = vpop.f32.mrb[0].mxu0
      %v1557 = vadd.f32 %v83, %v1556
      %v1558 = vpop.f32.mrb[0].mxu0
      %1559 = vdwg.mxu0
      %v1560 = vadd.f32 %v1442, %v1546
      %v1561 = vadd.f32 %v1443, %v1549
      %v1562 = vadd.f32 %v1444, %v1554
      %v1563 = vadd.f32 %v1445, %v1557
      %v1564 = vmul.f32 %v611, %v1560
      %v1565 = vmul.f32 %v611, %v1561
      %v1566 = vmul.f32 %v611, %v1562
      %v1567 = vmul.f32 %v611, %v1563
      %v1568 = vadd.f32 %v1092, %v1564
      %v1569 = vadd.f32 %v1093, %v1565
      %v1570 = vadd.f32 %v1094, %v1566
      %v1571 = vadd.f32 %v1095, %v1567
      %v1572 = vpack.c.bf16 %v1569, %v1568
      %v1573 = vpack.c.bf16 %v1571, %v1570
      %1574 = vmatprep.subr.bf16.mxu0 0
      %1575 = vmatpush1.bf16.msra.mxu0 %v1572
      %1576 = vmatprep.subr.bf16.mxu0 0
      %1577 = vmatpush1.bf16.msra.mxu0 %v1573
      %1578 = vmatprep.subr.bf16.mxu0 0
      %1579 = vmatpush1.bf16.msra.mxu0 0
      %1580 = vmatprep.subr.bf16.mxu0 0
      %1581 = vmatpush1.bf16.msra.mxu0 0
      %1582 = vmatprep.subr.bf16.mxu0 0
      %1583 = vmatpush1.bf16.msra.mxu0 0
      %1584 = vmatprep.subr.bf16.mxu0 0
      %1585 = vmatpush1.bf16.msra.mxu0 0
      %1586 = vmatprep.subr.bf16.mxu0 0
      %1587 = vmatpush1.bf16.msra.mxu0 0
      %1588 = vmatprep.subr.bf16.mxu0 0
      %1589 = vmatpush1.bf16.msra.mxu0 0
      %1590 = vmatprep.subr.bf16.mxu0 0
      %1591 = vmatpush1.bf16.msra.mxu0 0
      %1592 = vmatprep.subr.bf16.mxu0 0
      %1593 = vmatpush1.bf16.msra.mxu0 0
      %1594 = vmatprep.subr.bf16.mxu0 0
      %1595 = vmatpush1.bf16.msra.mxu0 0
      %1596 = vmatprep.subr.bf16.mxu0 0
      %1597 = vmatpush1.bf16.msra.mxu0 0
      %1598 = vmatprep.subr.bf16.mxu0 0
      %1599 = vmatpush1.bf16.msra.mxu0 0
      %1600 = vmatprep.subr.bf16.mxu0 0
      %1601 = vmatpush1.bf16.msra.mxu0 0
      %1602 = vmatprep.subr.bf16.mxu0 0
      %1603 = vmatpush1.bf16.msra.mxu0 0
      %1604 = vmatprep.subr.bf16.mxu0 0
      %1605 = vmatpush1.bf16.msra.mxu0 0
      %1606 = vmatprep.mubr.bf16.mxu0 0
      %1607 = vmatmul.mubr.bf16.gmra.mrb[0].mxu0 %v121
      %v1608 = vpop.f32.mrb[0].mxu0
      %v1609 = vadd.f32 %v44, %v1608
      %v1610 = vpop.f32.mrb[0].mxu0
      %v1611 = vpop.f32.mrb[0].mxu0
      %v1612 = vadd.f32 %v49, %v1611
      %v1613 = vpop.f32.mrb[0].mxu0
      %1614 = vmatprep.mubr.bf16.mxu0 0
      %1615 = vmatmul.mubr.bf16.gmra.mrb[0].mxu0 %v124
      %v1616 = vpop.f32.mrb[0].mxu0
      %v1617 = vadd.f32 %v54, %v1616
      %v1618 = vpop.f32.mrb[0].mxu0
      %v1619 = vpop.f32.mrb[0].mxu0
      %v1620 = vadd.f32 %v59, %v1619
      %v1621 = vpop.f32.mrb[0].mxu0
      %1622 = vdwg.mxu0
      %v1623 = vtanh.pop %v1609
      %v1624 = vtanh.pop %v1612
      %v1625 = vtanh.pop %v1617
      %v1626 = vtanh.pop %v1620
      %v1627 = vpack.c.bf16 %v1624, %v1623
      %v1628 = vpack.c.bf16 %v1626, %v1625
      %1629 = vmatprep.subr.bf16.mxu0 0
      %1630 = vmatpush1.bf16.msra.mxu0 %v1627
      %1631 = vmatprep.subr.bf16.mxu0 0
      %1632 = vmatpush1.bf16.msra.mxu0 %v1628
      %1633 = vmatprep.subr.bf16.mxu0 0
      %1634 = vmatpush1.bf16.msra.mxu0 0
      %1635 = vmatprep.subr.bf16.mxu0 0
      %1636 = vmatpush1.bf16.msra.mxu0 0
      %1637 = vmatprep.subr.bf16.mxu0 0
      %1638 = vmatpush1.bf16.msra.mxu0 0
      %1639 = vmatprep.subr.bf16.mxu0 0
      %1640 = vmatpush1.bf16.msra.mxu0 0
      %1641 = vmatprep.subr.bf16.mxu0 0
      %1642 = vmatpush1.bf16.msra.mxu0 0
      %1643 = vmatprep.subr.bf16.mxu0 0
      %1644 = vmatpush1.bf16.msra.mxu0 0
      %1645 = vmatprep.subr.bf16.mxu0 0
      %1646 = vmatpush1.bf16.msra.mxu0 0
      %1647 = vmatprep.subr.bf16.mxu0 0
      %1648 = vmatpush1.bf16.msra.mxu0 0
      %1649 = vmatprep.subr.bf16.mxu0 0
      %1650 = vmatpush1.bf16.msra.mxu0 0
      %1651 = vmatprep.subr.bf16.mxu0 0
      %1652 = vmatpush1.bf16.msra.mxu0 0
      %1653 = vmatprep.subr.bf16.mxu0 0
      %1654 = vmatpush1.bf16.msra.mxu0 0
      %1655 = vmatprep.subr.bf16.mxu0 0
      %1656 = vmatpush1.bf16.msra.mxu0 0
      %1657 = vmatprep.subr.bf16.mxu0 0
      %1658 = vmatpush1.bf16.msra.mxu0 0
      %1659 = vmatprep.subr.bf16.mxu0 0
      %1660 = vmatpush1.bf16.msra.mxu0 0
      %1661 = vmatprep.mubr.bf16.mxu0 0
      %1662 = vmatmul.mubr.bf16.gmra.mrb[0].mxu0 %v192
      %v1663 = vpop.f32.mrb[0].mxu0
      %v1664 = vadd.f32 %v68, %v1663
      %v1665 = vpop.f32.mrb[0].mxu0
      %v1666 = vpop.f32.mrb[0].mxu0
      %v1667 = vadd.f32 %v73, %v1666
      %v1668 = vpop.f32.mrb[0].mxu0
      %1669 = vmatprep.mubr.bf16.mxu0 0
      %1670 = vmatmul.mubr.bf16.gmra.mrb[0].mxu0 %v195
      %v1671 = vpop.f32.mrb[0].mxu0
      %v1672 = vadd.f32 %v78, %v1671
      %v1673 = vpop.f32.mrb[0].mxu0
      %v1674 = vpop.f32.mrb[0].mxu0
      %v1675 = vadd.f32 %v83, %v1674
      %v1676 = vpop.f32.mrb[0].mxu0
      %1677 = vdwg.mxu0
      %v1678 = vmul.f32 %v246, %v1664
      %v1679 = vmul.f32 %v246, %v1667
      %v1680 = vmul.f32 %v246, %v1672
      %v1681 = vmul.f32 %v246, %v1675
      %v1682 = vadd.f32 %v1568, %v1678
      %v1683 = vadd.f32 %v1569, %v1679
      %v1684 = vadd.f32 %v1570, %v1680
      %v1685 = vadd.f32 %v1571, %v1681
      %v1686 = vpack.c.bf16 %v1683, %v1682
      %v1687 = vpack.c.bf16 %v1685, %v1684
      %1688 = vmatprep.subr.bf16.mxu0 0
      %1689 = vmatpush1.bf16.msra.mxu0 %v1686
      %1690 = vmatprep.subr.bf16.mxu0 0
      %1691 = vmatpush1.bf16.msra.mxu0 %v1687
      %1692 = vmatprep.subr.bf16.mxu0 0
      %1693 = vmatpush1.bf16.msra.mxu0 0
      %1694 = vmatprep.subr.bf16.mxu0 0
      %1695 = vmatpush1.bf16.msra.mxu0 0
      %1696 = vmatprep.subr.bf16.mxu0 0
      %1697 = vmatpush1.bf16.msra.mxu0 0
      %1698 = vmatprep.subr.bf16.mxu0 0
      %1699 = vmatpush1.bf16.msra.mxu0 0
      %1700 = vmatprep.subr.bf16.mxu0 0
      %1701 = vmatpush1.bf16.msra.mxu0 0
      %1702 = vmatprep.subr.bf16.mxu0 0
      %1703 = vmatpush1.bf16.msra.mxu0 0
      %1704 = vmatprep.subr.bf16.mxu0 0
      %1705 = vmatpush1.bf16.msra.mxu0 0
      %1706 = vmatprep.subr.bf16.mxu0 0
      %1707 = vmatpush1.bf16.msra.mxu0 0
      %1708 = vmatprep.subr.bf16.mxu0 0
      %1709 = vmatpush1.bf16.msra.mxu0 0
      %1710 = vmatprep.subr.bf16.mxu0 0
      %1711 = vmatpush1.bf16.msra.mxu0 0
      %1712 = vmatprep.subr.bf16.mxu0 0
      %1713 = vmatpush1.bf16.msra.mxu0 0
      %1714 = vmatprep.subr.bf16.mxu0 0
      %1715 = vmatpush1.bf16.msra.mxu0 0
      %1716 = vmatprep.subr.bf16.mxu0 0
      %1717 = vmatpush1.bf16.msra.mxu0 0
      %1718 = vmatprep.subr.bf16.mxu0 0
      %1719 = vmatpush1.bf16.msra.mxu0 0
      %1720 = vmatprep.mubr.bf16.mxu0 0
      %1721 = vmatmul.mubr.bf16.gmra.mrb[0].mxu0 %v121
      %v1722 = vpop.f32.mrb[0].mxu0
      %v1723 = vadd.f32 %v44, %v1722
      %v1724 = vpop.f32.mrb[0].mxu0
      %v1725 = vpop.f32.mrb[0].mxu0
      %v1726 = vadd.f32 %v49, %v1725
      %v1727 = vpop.f32.mrb[0].mxu0
      %1728 = vmatprep.mubr.bf16.mxu0 0
      %1729 = vmatmul.mubr.bf16.gmra.mrb[0].mxu0 %v124
      %v1730 = vpop.f32.mrb[0].mxu0
      %v1731 = vadd.f32 %v54, %v1730
      %v1732 = vpop.f32.mrb[0].mxu0
      %v1733 = vpop.f32.mrb[0].mxu0
      %v1734 = vadd.f32 %v59, %v1733
      %v1735 = vpop.f32.mrb[0].mxu0
      %1736 = vdwg.mxu0
      %v1737 = vtanh.pop %v1723
      %v1738 = vtanh.pop %v1726
      %v1739 = vtanh.pop %v1731
      %v1740 = vtanh.pop %v1734
      %v1741 = vpack.c.bf16 %v1738, %v1737
      %v1742 = vpack.c.bf16 %v1740, %v1739
      %1743 = vmatprep.subr.bf16.mxu0 0
      %1744 = vmatpush1.bf16.msra.mxu0 %v1741
      %1745 = vmatprep.subr.bf16.mxu0 0
      %1746 = vmatpush1.bf16.msra.mxu0 %v1742
      %1747 = vmatprep.subr.bf16.mxu0 0
      %1748 = vmatpush1.bf16.msra.mxu0 0
      %1749 = vmatprep.subr.bf16.mxu0 0
      %1750 = vmatpush1.bf16.msra.mxu0 0
      %1751 = vmatprep.subr.bf16.mxu0 0
      %1752 = vmatpush1.bf16.msra.mxu0 0
      %1753 = vmatprep.subr.bf16.mxu0 0
      %1754 = vmatpush1.bf16.msra.mxu0 0
      %1755 = vmatprep.subr.bf16.mxu0 0
      %1756 = vmatpush1.bf16.msra.mxu0 0
      %1757 = vmatprep.subr.bf16.mxu0 0
      %1758 = vmatpush1.bf16.msra.mxu0 0
      %1759 = vmatprep.subr.bf16.mxu0 0
      %1760 = vmatpush1.bf16.msra.mxu0 0
      %1761 = vmatprep.subr.bf16.mxu0 0
      %1762 = vmatpush1.bf16.msra.mxu0 0
      %1763 = vmatprep.subr.bf16.mxu0 0
      %1764 = vmatpush1.bf16.msra.mxu0 0
      %1765 = vmatprep.subr.bf16.mxu0 0
      %1766 = vmatpush1.bf16.msra.mxu0 0
      %1767 = vmatprep.subr.bf16.mxu0 0
      %1768 = vmatpush1.bf16.msra.mxu0 0
      %1769 = vmatprep.subr.bf16.mxu0 0
      %1770 = vmatpush1.bf16.msra.mxu0 0
      %1771 = vmatprep.subr.bf16.mxu0 0
      %1772 = vmatpush1.bf16.msra.mxu0 0
      %1773 = vmatprep.subr.bf16.mxu0 0
      %1774 = vmatpush1.bf16.msra.mxu0 0
      %1775 = vmatprep.mubr.bf16.mxu0 0
      %1776 = vmatmul.mubr.bf16.gmra.mrb[0].mxu0 %v192
      %v1777 = vpop.f32.mrb[0].mxu0
      %v1778 = vadd.f32 %v68, %v1777
      %v1779 = vpop.f32.mrb[0].mxu0
      %v1780 = vpop.f32.mrb[0].mxu0
      %v1781 = vadd.f32 %v73, %v1780
      %v1782 = vpop.f32.mrb[0].mxu0
      %1783 = vmatprep.mubr.bf16.mxu0 0
      %1784 = vmatmul.mubr.bf16.gmra.mrb[0].mxu0 %v195
      %v1785 = vpop.f32.mrb[0].mxu0
      %v1786 = vadd.f32 %v78, %v1785
      %v1787 = vpop.f32.mrb[0].mxu0
      %v1788 = vpop.f32.mrb[0].mxu0
      %v1789 = vadd.f32 %v83, %v1788
      %v1790 = vpop.f32.mrb[0].mxu0
      %1791 = vdwg.mxu0
      %v1792 = vmul.f32 %v1778, 2.0
      %v1793 = vmul.f32 %v1781, 2.0
      %v1794 = vmul.f32 %v1786, 2.0
      %v1795 = vmul.f32 %v1789, 2.0
      %v1796 = vadd.f32 %v1664, %v1792
      %v1797 = vadd.f32 %v1667, %v1793
      %v1798 = vadd.f32 %v1672, %v1794
      %v1799 = vadd.f32 %v1675, %v1795
      %v1800 = vmul.f32 %v246, %v1778
      %v1801 = vmul.f32 %v246, %v1781
      %v1802 = vmul.f32 %v246, %v1786
      %v1803 = vmul.f32 %v246, %v1789
      %v1804 = vadd.f32 %v1568, %v1800
      %v1805 = vadd.f32 %v1569, %v1801
      %v1806 = vadd.f32 %v1570, %v1802
      %v1807 = vadd.f32 %v1571, %v1803
      %v1808 = vpack.c.bf16 %v1805, %v1804
      %v1809 = vpack.c.bf16 %v1807, %v1806
      %1810 = vmatprep.subr.bf16.mxu0 0
      %1811 = vmatpush1.bf16.msra.mxu0 %v1808
      %1812 = vmatprep.subr.bf16.mxu0 0
      %1813 = vmatpush1.bf16.msra.mxu0 %v1809
      %1814 = vmatprep.subr.bf16.mxu0 0
      %1815 = vmatpush1.bf16.msra.mxu0 0
      %1816 = vmatprep.subr.bf16.mxu0 0
      %1817 = vmatpush1.bf16.msra.mxu0 0
      %1818 = vmatprep.subr.bf16.mxu0 0
      %1819 = vmatpush1.bf16.msra.mxu0 0
      %1820 = vmatprep.subr.bf16.mxu0 0
      %1821 = vmatpush1.bf16.msra.mxu0 0
      %1822 = vmatprep.subr.bf16.mxu0 0
      %1823 = vmatpush1.bf16.msra.mxu0 0
      %1824 = vmatprep.subr.bf16.mxu0 0
      %1825 = vmatpush1.bf16.msra.mxu0 0
      %1826 = vmatprep.subr.bf16.mxu0 0
      %1827 = vmatpush1.bf16.msra.mxu0 0
      %1828 = vmatprep.subr.bf16.mxu0 0
      %1829 = vmatpush1.bf16.msra.mxu0 0
      %1830 = vmatprep.subr.bf16.mxu0 0
      %1831 = vmatpush1.bf16.msra.mxu0 0
      %1832 = vmatprep.subr.bf16.mxu0 0
      %1833 = vmatpush1.bf16.msra.mxu0 0
      %1834 = vmatprep.subr.bf16.mxu0 0
      %1835 = vmatpush1.bf16.msra.mxu0 0
      %1836 = vmatprep.subr.bf16.mxu0 0
      %1837 = vmatpush1.bf16.msra.mxu0 0
      %1838 = vmatprep.subr.bf16.mxu0 0
      %1839 = vmatpush1.bf16.msra.mxu0 0
      %1840 = vmatprep.subr.bf16.mxu0 0
      %1841 = vmatpush1.bf16.msra.mxu0 0
      %1842 = vmatprep.mubr.bf16.mxu0 0
      %1843 = vmatmul.mubr.bf16.gmra.mrb[0].mxu0 %v121
      %v1844 = vpop.f32.mrb[0].mxu0
      %v1845 = vadd.f32 %v44, %v1844
      %v1846 = vpop.f32.mrb[0].mxu0
      %v1847 = vpop.f32.mrb[0].mxu0
      %v1848 = vadd.f32 %v49, %v1847
      %v1849 = vpop.f32.mrb[0].mxu0
      %1850 = vmatprep.mubr.bf16.mxu0 0
      %1851 = vmatmul.mubr.bf16.gmra.mrb[0].mxu0 %v124
      %v1852 = vpop.f32.mrb[0].mxu0
      %v1853 = vadd.f32 %v54, %v1852
      %v1854 = vpop.f32.mrb[0].mxu0
      %v1855 = vpop.f32.mrb[0].mxu0
      %v1856 = vadd.f32 %v59, %v1855
      %v1857 = vpop.f32.mrb[0].mxu0
      %1858 = vdwg.mxu0
      %v1859 = vtanh.pop %v1845
      %v1860 = vtanh.pop %v1848
      %v1861 = vtanh.pop %v1853
      %v1862 = vtanh.pop %v1856
      %v1863 = vpack.c.bf16 %v1860, %v1859
      %v1864 = vpack.c.bf16 %v1862, %v1861
      %1865 = vmatprep.subr.bf16.mxu0 0
      %1866 = vmatpush1.bf16.msra.mxu0 %v1863
      %1867 = vmatprep.subr.bf16.mxu0 0
      %1868 = vmatpush1.bf16.msra.mxu0 %v1864
      %1869 = vmatprep.subr.bf16.mxu0 0
      %1870 = vmatpush1.bf16.msra.mxu0 0
      %1871 = vmatprep.subr.bf16.mxu0 0
      %1872 = vmatpush1.bf16.msra.mxu0 0
      %1873 = vmatprep.subr.bf16.mxu0 0
      %1874 = vmatpush1.bf16.msra.mxu0 0
      %1875 = vmatprep.subr.bf16.mxu0 0
      %1876 = vmatpush1.bf16.msra.mxu0 0
      %1877 = vmatprep.subr.bf16.mxu0 0
      %1878 = vmatpush1.bf16.msra.mxu0 0
      %1879 = vmatprep.subr.bf16.mxu0 0
      %1880 = vmatpush1.bf16.msra.mxu0 0
      %1881 = vmatprep.subr.bf16.mxu0 0
      %1882 = vmatpush1.bf16.msra.mxu0 0
      %1883 = vmatprep.subr.bf16.mxu0 0
      %1884 = vmatpush1.bf16.msra.mxu0 0
      %1885 = vmatprep.subr.bf16.mxu0 0
      %1886 = vmatpush1.bf16.msra.mxu0 0
      %1887 = vmatprep.subr.bf16.mxu0 0
      %1888 = vmatpush1.bf16.msra.mxu0 0
      %1889 = vmatprep.subr.bf16.mxu0 0
      %1890 = vmatpush1.bf16.msra.mxu0 0
      %1891 = vmatprep.subr.bf16.mxu0 0
      %1892 = vmatpush1.bf16.msra.mxu0 0
      %1893 = vmatprep.subr.bf16.mxu0 0
      %1894 = vmatpush1.bf16.msra.mxu0 0
      %1895 = vmatprep.subr.bf16.mxu0 0
      %1896 = vmatpush1.bf16.msra.mxu0 0
      %1897 = vmatprep.mubr.bf16.mxu0 0
      %1898 = vmatmul.mubr.bf16.gmra.mrb[0].mxu0 %v192
      %v1899 = vpop.f32.mrb[0].mxu0
      %v1900 = vadd.f32 %v68, %v1899
      %v1901 = vpop.f32.mrb[0].mxu0
      %v1902 = vpop.f32.mrb[0].mxu0
      %v1903 = vadd.f32 %v73, %v1902
      %v1904 = vpop.f32.mrb[0].mxu0
      %1905 = vmatprep.mubr.bf16.mxu0 0
      %1906 = vmatmul.mubr.bf16.gmra.mrb[0].mxu0 %v195
      %v1907 = vpop.f32.mrb[0].mxu0
      %v1908 = vadd.f32 %v78, %v1907
      %v1909 = vpop.f32.mrb[0].mxu0
      %v1910 = vpop.f32.mrb[0].mxu0
      %v1911 = vadd.f32 %v83, %v1910
      %v1912 = vpop.f32.mrb[0].mxu0
      %1913 = vdwg.mxu0
      %v1914 = vmul.f32 %v1900, 2.0
      %v1915 = vmul.f32 %v1903, 2.0
      %v1916 = vmul.f32 %v1908, 2.0
      %v1917 = vmul.f32 %v1911, 2.0
      %v1918 = vadd.f32 %v1796, %v1914
      %v1919 = vadd.f32 %v1797, %v1915
      %v1920 = vadd.f32 %v1798, %v1916
      %v1921 = vadd.f32 %v1799, %v1917
      %v1922 = vmul.f32 %v491, %v1900
      %v1923 = vmul.f32 %v491, %v1903
      %v1924 = vmul.f32 %v491, %v1908
      %v1925 = vmul.f32 %v491, %v1911
      %v1926 = vadd.f32 %v1568, %v1922
      %v1927 = vadd.f32 %v1569, %v1923
      %v1928 = vadd.f32 %v1570, %v1924
      %v1929 = vadd.f32 %v1571, %v1925
      %v1930 = vpack.c.bf16 %v1927, %v1926
      %v1931 = vpack.c.bf16 %v1929, %v1928
      %1932 = vmatprep.subr.bf16.mxu0 0
      %1933 = vmatpush1.bf16.msra.mxu0 %v1930
      %1934 = vmatprep.subr.bf16.mxu0 0
      %1935 = vmatpush1.bf16.msra.mxu0 %v1931
      %1936 = vmatprep.subr.bf16.mxu0 0
      %1937 = vmatpush1.bf16.msra.mxu0 0
      %1938 = vmatprep.subr.bf16.mxu0 0
      %1939 = vmatpush1.bf16.msra.mxu0 0
      %1940 = vmatprep.subr.bf16.mxu0 0
      %1941 = vmatpush1.bf16.msra.mxu0 0
      %1942 = vmatprep.subr.bf16.mxu0 0
      %1943 = vmatpush1.bf16.msra.mxu0 0
      %1944 = vmatprep.subr.bf16.mxu0 0
      %1945 = vmatpush1.bf16.msra.mxu0 0
      %1946 = vmatprep.subr.bf16.mxu0 0
      %1947 = vmatpush1.bf16.msra.mxu0 0
      %1948 = vmatprep.subr.bf16.mxu0 0
      %1949 = vmatpush1.bf16.msra.mxu0 0
      %1950 = vmatprep.subr.bf16.mxu0 0
      %1951 = vmatpush1.bf16.msra.mxu0 0
      %1952 = vmatprep.subr.bf16.mxu0 0
      %1953 = vmatpush1.bf16.msra.mxu0 0
      %1954 = vmatprep.subr.bf16.mxu0 0
      %1955 = vmatpush1.bf16.msra.mxu0 0
      %1956 = vmatprep.subr.bf16.mxu0 0
      %1957 = vmatpush1.bf16.msra.mxu0 0
      %1958 = vmatprep.subr.bf16.mxu0 0
      %1959 = vmatpush1.bf16.msra.mxu0 0
      %1960 = vmatprep.subr.bf16.mxu0 0
      %1961 = vmatpush1.bf16.msra.mxu0 0
      %1962 = vmatprep.subr.bf16.mxu0 0
      %1963 = vmatpush1.bf16.msra.mxu0 0
      %1964 = vmatprep.mubr.bf16.mxu0 0
      %1965 = vmatmul.mubr.bf16.gmra.mrb[0].mxu0 %v121
      %v1966 = vpop.f32.mrb[0].mxu0
      %v1967 = vadd.f32 %v44, %v1966
      %v1968 = vpop.f32.mrb[0].mxu0
      %v1969 = vpop.f32.mrb[0].mxu0
      %v1970 = vadd.f32 %v49, %v1969
      %v1971 = vpop.f32.mrb[0].mxu0
      %1972 = vmatprep.mubr.bf16.mxu0 0
      %1973 = vmatmul.mubr.bf16.gmra.mrb[0].mxu0 %v124
      %v1974 = vpop.f32.mrb[0].mxu0
      %v1975 = vadd.f32 %v54, %v1974
      %v1976 = vpop.f32.mrb[0].mxu0
      %v1977 = vpop.f32.mrb[0].mxu0
      %v1978 = vadd.f32 %v59, %v1977
      %v1979 = vpop.f32.mrb[0].mxu0
      %1980 = vdwg.mxu0
      %v1981 = vtanh.pop %v1967
      %v1982 = vtanh.pop %v1970
      %v1983 = vtanh.pop %v1975
      %v1984 = vtanh.pop %v1978
      %v1985 = vpack.c.bf16 %v1982, %v1981
      %v1986 = vpack.c.bf16 %v1984, %v1983
      %1987 = vmatprep.subr.bf16.mxu0 0
      %1988 = vmatpush1.bf16.msra.mxu0 %v1985
      %1989 = vmatprep.subr.bf16.mxu0 0
      %1990 = vmatpush1.bf16.msra.mxu0 %v1986
      %1991 = vmatprep.subr.bf16.mxu0 0
      %1992 = vmatpush1.bf16.msra.mxu0 0
      %1993 = vmatprep.subr.bf16.mxu0 0
      %1994 = vmatpush1.bf16.msra.mxu0 0
      %1995 = vmatprep.subr.bf16.mxu0 0
      %1996 = vmatpush1.bf16.msra.mxu0 0
      %1997 = vmatprep.subr.bf16.mxu0 0
      %1998 = vmatpush1.bf16.msra.mxu0 0
      %1999 = vmatprep.subr.bf16.mxu0 0
      %2000 = vmatpush1.bf16.msra.mxu0 0
      %2001 = vmatprep.subr.bf16.mxu0 0
      %2002 = vmatpush1.bf16.msra.mxu0 0
      %2003 = vmatprep.subr.bf16.mxu0 0
      %2004 = vmatpush1.bf16.msra.mxu0 0
      %2005 = vmatprep.subr.bf16.mxu0 0
      %2006 = vmatpush1.bf16.msra.mxu0 0
      %2007 = vmatprep.subr.bf16.mxu0 0
      %2008 = vmatpush1.bf16.msra.mxu0 0
      %2009 = vmatprep.subr.bf16.mxu0 0
      %2010 = vmatpush1.bf16.msra.mxu0 0
      %2011 = vmatprep.subr.bf16.mxu0 0
      %2012 = vmatpush1.bf16.msra.mxu0 0
      %2013 = vmatprep.subr.bf16.mxu0 0
      %2014 = vmatpush1.bf16.msra.mxu0 0
      %2015 = vmatprep.subr.bf16.mxu0 0
      %2016 = vmatpush1.bf16.msra.mxu0 0
      %2017 = vmatprep.subr.bf16.mxu0 0
      %2018 = vmatpush1.bf16.msra.mxu0 0
      %2019 = vmatprep.mubr.bf16.mxu0 0
      %2020 = vmatmul.mubr.bf16.gmra.mrb[0].mxu0 %v192
      %v2021 = vpop.f32.mrb[0].mxu0
      %v2022 = vadd.f32 %v68, %v2021
      %v2023 = vpop.f32.mrb[0].mxu0
      %v2024 = vpop.f32.mrb[0].mxu0
      %v2025 = vadd.f32 %v73, %v2024
      %v2026 = vpop.f32.mrb[0].mxu0
      %2027 = vmatprep.mubr.bf16.mxu0 0
      %2028 = vmatmul.mubr.bf16.gmra.mrb[0].mxu0 %v195
      %v2029 = vpop.f32.mrb[0].mxu0
      %v2030 = vadd.f32 %v78, %v2029
      %v2031 = vpop.f32.mrb[0].mxu0
      %v2032 = vpop.f32.mrb[0].mxu0
      %v2033 = vadd.f32 %v83, %v2032
      %v2034 = vpop.f32.mrb[0].mxu0
      %2035 = vdwg.mxu0
      %v2036 = vadd.f32 %v1918, %v2022
      %v2037 = vadd.f32 %v1919, %v2025
      %v2038 = vadd.f32 %v1920, %v2030
      %v2039 = vadd.f32 %v1921, %v2033
      %v2040 = vmul.f32 %v611, %v2036
      %v2041 = vmul.f32 %v611, %v2037
      %v2042 = vmul.f32 %v611, %v2038
      %v2043 = vmul.f32 %v611, %v2039
      %v2044 = vadd.f32 %v1568, %v2040
      %v2045 = vadd.f32 %v1569, %v2041
      %v2046 = vadd.f32 %v1570, %v2042
      %v2047 = vadd.f32 %v1571, %v2043
      %s2048 = smul.u32 %s95, 32
      %s2049 = scalar_lea.vmem [#allocation2], %s2048
      %2050 = vst.msk [vmem:[%s2049] sm:$0xff] %vm89, %v2044
      %2051 = vst.msk [vmem:[%s2049 + $0x8] sm:$0xff] %vm89, %v2045
      %2052 = vst.msk [vmem:[%s2049 + $0x10] sm:$0xff] %vm89, %v2046
      %2053 = vst.msk [vmem:[%s2049 + $0x18] sm:$0xff] %vm89, %v2047
    $region26: #{tpu_custom_call.1} parent=1 // loop_footer
      %s99 = sadd.s32 1, %s95
    $region27: #{tpu_custom_call.1} parent=1 // loop_footer_branch
      %94 = sbr.rel target = $region23
    $region28: #{tpu_custom_call.1} parent=1 // loop_exit
      _
    %v2054 = vld [vmem:[#allocation2] sm:$0xff]
    %v2055 = vld [vmem:[#allocation2 + $0x8] sm:$0xff]
    %v2056 = vld [vmem:[#allocation2 + $0x10] sm:$0xff]
    %v2057 = vld [vmem:[#allocation2 + $0x18] sm:$0xff]
    %v2058 = vld [vmem:[#allocation2 + $0x20] sm:$0xff]
    %v2059 = vld [vmem:[#allocation2 + $0x28] sm:$0xff]
    %v2060 = vld [vmem:[#allocation2 + $0x30] sm:$0xff]
    %v2061 = vld [vmem:[#allocation2 + $0x38] sm:$0xff]
    %v2062 = vld [vmem:[#allocation2 + $0x40] sm:$0xff]
    %v2063 = vld [vmem:[#allocation2 + $0x48] sm:$0xff]
    %v2064 = vld [vmem:[#allocation2 + $0x50] sm:$0xff]
    %v2065 = vld [vmem:[#allocation2 + $0x58] sm:$0xff]
    %v2066 = vld [vmem:[#allocation2 + $0x60] sm:$0xff]
    %v2067 = vld [vmem:[#allocation2 + $0x68] sm:$0xff]
    %v2068 = vld [vmem:[#allocation2 + $0x70] sm:$0xff]
    %v2069 = vld [vmem:[#allocation2 + $0x78] sm:$0xff]
    %v2070 = vld [vmem:[#allocation2 + $0x80] sm:$0xff]
    %v2071 = vld [vmem:[#allocation2 + $0x88] sm:$0xff]
    %v2072 = vld [vmem:[#allocation2 + $0x90] sm:$0xff]
    %v2073 = vld [vmem:[#allocation2 + $0x98] sm:$0xff]
    %v2074 = vld [vmem:[#allocation2 + $0xa0] sm:$0xff]
    %v2075 = vld [vmem:[#allocation2 + $0xa8] sm:$0xff]
    %v2076 = vld [vmem:[#allocation2 + $0xb0] sm:$0xff]
    %v2077 = vld [vmem:[#allocation2 + $0xb8] sm:$0xff]
    %v2078 = vld [vmem:[#allocation2 + $0xc0] sm:$0xff]
    %v2079 = vld [vmem:[#allocation2 + $0xc8] sm:$0xff]
    %v2080 = vld [vmem:[#allocation2 + $0xd0] sm:$0xff]
    %v2081 = vld [vmem:[#allocation2 + $0xd8] sm:$0xff]
    %v2082 = vld [vmem:[#allocation2 + $0xe0] sm:$0xff]
    %v2083 = vld [vmem:[#allocation2 + $0xe8] sm:$0xff]
    %v2084 = vld [vmem:[#allocation2 + $0xf0] sm:$0xff]
    %v2085 = vld [vmem:[#allocation2 + $0xf8] sm:$0xff]
    %2086 = vxpose.xlu0.b32.start [1/16] %v2054, 128
    %2087 = vxpose.xlu0.b32.cont [2/16] %v2055, 128
    %2088 = vxpose.xlu0.b32.cont [3/16] %v2056, 128
    %2089 = vxpose.xlu0.b32.cont [4/16] %v2057, 128
    %2090 = vxpose.xlu0.b32.cont [5/16] %v2058, 128
    %2091 = vxpose.xlu0.b32.cont [6/16] %v2059, 128
    %2092 = vxpose.xlu0.b32.cont [7/16] %v2060, 128
    %2093 = vxpose.xlu0.b32.cont [8/16] %v2061, 128
    %2094 = vxpose.xlu0.b32.cont [9/16] %v2062, 128
    %2095 = vxpose.xlu0.b32.cont [10/16] %v2063, 128
    %2096 = vxpose.xlu0.b32.cont [11/16] %v2064, 128
    %2097 = vxpose.xlu0.b32.cont [12/16] %v2065, 128
    %2098 = vxpose.xlu0.b32.cont [13/16] %v2066, 128
    %2099 = vxpose.xlu0.b32.cont [14/16] %v2067, 128
    %2100 = vxpose.xlu0.b32.cont [15/16] %v2068, 128
    %2101 = vxpose.xlu0.b32.end [16/16] %v2069, 128
    %v2102 = vpop.trf.xlu0
    %v2103 = vpop.trf.xlu0
    %v2104 = vpop.trf.xlu0
    %v2105 = vpop.trf.xlu0
    %v2106 = vpop.trf.xlu0
    %v2107 = vpop.trf.xlu0
    %v2108 = vpop.trf.xlu0
    %v2109 = vpop.trf.xlu0
    %v2110 = vpop.trf.xlu0
    %v2111 = vpop.trf.xlu0
    %v2112 = vpop.trf.xlu0
    %v2113 = vpop.trf.xlu0
    %v2114 = vpop.trf.xlu0
    %v2115 = vpop.trf.xlu0
    %v2116 = vpop.trf.xlu0
    %v2117 = vpop.trf.xlu0
    %2118 = vxpose.xlu0.b32.start [1/16] %v2070, 128
    %2119 = vxpose.xlu0.b32.cont [2/16] %v2071, 128
    %2120 = vxpose.xlu0.b32.cont [3/16] %v2072, 128
    %2121 = vxpose.xlu0.b32.cont [4/16] %v2073, 128
    %2122 = vxpose.xlu0.b32.cont [5/16] %v2074, 128
    %2123 = vxpose.xlu0.b32.cont [6/16] %v2075, 128
    %2124 = vxpose.xlu0.b32.cont [7/16] %v2076, 128
    %2125 = vxpose.xlu0.b32.cont [8/16] %v2077, 128
    %2126 = vxpose.xlu0.b32.cont [9/16] %v2078, 128
    %2127 = vxpose.xlu0.b32.cont [10/16] %v2079, 128
    %2128 = vxpose.xlu0.b32.cont [11/16] %v2080, 128
    %2129 = vxpose.xlu0.b32.cont [12/16] %v2081, 128
    %2130 = vxpose.xlu0.b32.cont [13/16] %v2082, 128
    %2131 = vxpose.xlu0.b32.cont [14/16] %v2083, 128
    %2132 = vxpose.xlu0.b32.cont [15/16] %v2084, 128
    %2133 = vxpose.xlu0.b32.end [16/16] %v2085, 128
    %v2134 = vpop.trf.xlu0
    %v2135 = vpop.trf.xlu0
    %v2136 = vpop.trf.xlu0
    %v2137 = vpop.trf.xlu0
    %v2138 = vpop.trf.xlu0
    %v2139 = vpop.trf.xlu0
    %v2140 = vpop.trf.xlu0
    %v2141 = vpop.trf.xlu0
    %v2142 = vpop.trf.xlu0
    %v2143 = vpop.trf.xlu0
    %v2144 = vpop.trf.xlu0
    %v2145 = vpop.trf.xlu0
    %v2146 = vpop.trf.xlu0
    %v2147 = vpop.trf.xlu0
    %v2148 = vpop.trf.xlu0
    %v2149 = vpop.trf.xlu0
    %2150 = vst [vmem:[#allocation5] sm:$0xff] %v2102
    %2151 = vst [vmem:[#allocation5 + $0x8] sm:$0xff] %v2134
    // Predicated region
    $region29: #{tpu_custom_call.1} parent=1 // pred_check
      _
    $region30: #{tpu_custom_call.1} parent=1 // pred_check_branch
      %2153 = sbr.rel (0) target = $region32
    $region31: #{tpu_custom_call.1} parent=1 // pred_region
      %s2155 = ssub.s32 256, 256
      %2156 = vsyncadd [#allocation6], %s2155
      %s2158 = sshll.u32 [#allocation5], 4
      %s2159 = int_to_ptr.vmem [resolvable:$true] %s2158
      %2161 = dma.vmem_to_hbm [thread:$0]  %s2159, 256, %s6, [#allocation6]
    $region32: #{tpu_custom_call.1} parent=1 // pred_fallthru
      _
    // Predicated region
    $region33: #{tpu_custom_call.1} parent=1 // pred_check
      _
    $region34: #{tpu_custom_call.1} parent=1 // pred_check_branch
      %2163 = sbr.rel (0) target = $region36
    $region35: #{tpu_custom_call.1} parent=1 // pred_region
      %2164 = dma.done [#allocation6], 256
    $region36: #{tpu_custom_call.1} parent=1 // pred_fallthru
      _
    %2165 = vsyncpa [#allocation6], 1

</llo_original>
